<compile_context>
chip_gen: v7x
topology: tpu7x:2x2x1
jax: 0.10.0
libtpu: 0.0.40
codegen_flags: <defaults>
</compile_context>

<pallas_src>
import math

import jax
import jax.numpy as jnp
from jax.experimental import pallas as pl
from jax.experimental.pallas import tpu as pltpu

# Problem sizes (small, consistent with the module's forward).
B, S, SC, E, H, FF = 2, 8, 8, 32, 4, 64
DH = E // H
LN_EPS = 1e-5  # nn.LayerNorm default

# ---------------------------------------------------------------------------
# Packed parameter slab layout (rows x 128 lanes, f32).
# Weight matrices are stored pre-transposed so the kernel does x @ W.
# ---------------------------------------------------------------------------
R_SA_WQKV = 0            # (E, 3E)   in_proj.T, Q block pre-scaled by 1/sqrt(DH)
R_CA_WQKV = R_SA_WQKV + E
R_SA_WO = R_CA_WQKV + E  # (E, E)    out_proj.weight.T
R_CA_WO = R_SA_WO + E
R_W1 = R_CA_WO + E       # (E, FF)   ffn[0].weight.T
R_W2 = R_W1 + E          # (FF, E)   ffn[2].weight.T
R_VEC = R_W2 + FF        # 12 vectors, one per row (col 0..width)
(V_SA_BQKV, V_CA_BQKV, V_SA_BO, V_CA_BO, V_B1, V_B2,
 V_LN1G, V_LN1B, V_LN2G, V_LN2B, V_LN3G, V_LN3B) = range(12)
N_VEC = 12
SLAB_ROWS = ((R_VEC + N_VEC + 7) // 8) * 8   # 240
SLAB_COLS = 128


def pack_params(p):
    """Host-side prep: transpose weights, fold q-scale, pack everything into one slab."""
    scale = 1.0 / math.sqrt(DH)

    def prep_attn(w_qkv, b_qkv, w_o):
        wt = w_qkv.T                                                     # (E, 3E)
        wt = jnp.concatenate([wt[:, :E] * scale, wt[:, E:]], axis=1)     # fold q scale
        bt = jnp.concatenate([b_qkv[:, :E] * scale, b_qkv[:, E:]], axis=1)
        return wt, bt, w_o.T

    sa_wqkv_t, sa_bqkv_s, sa_wo_t = prep_attn(p["sa_wqkv"], p["sa_bqkv"], p["sa_wo"])
    ca_wqkv_t, ca_bqkv_s, ca_wo_t = prep_attn(p["ca_wqkv"], p["ca_bqkv"], p["ca_wo"])

    slab = jnp.zeros((SLAB_ROWS, SLAB_COLS), jnp.float32)

    def put(s, r0, arr):
        return s.at[r0:r0 + arr.shape[0], 0:arr.shape[1]].set(arr.astype(jnp.float32))

    slab = put(slab, R_SA_WQKV, sa_wqkv_t)
    slab = put(slab, R_CA_WQKV, ca_wqkv_t)
    slab = put(slab, R_SA_WO, sa_wo_t)
    slab = put(slab, R_CA_WO, ca_wo_t)
    slab = put(slab, R_W1, p["w1"].T)
    slab = put(slab, R_W2, p["w2"].T)
    vecs = [sa_bqkv_s, ca_bqkv_s, p["sa_bo"], p["ca_bo"], p["b1"], p["b2"],
            p["ln1_g"], p["ln1_b"], p["ln2_g"], p["ln2_b"], p["ln3_g"], p["ln3_b"]]
    for i, v in enumerate(vecs):
        slab = put(slab, R_VEC + i, v)
    return slab


# ---------------------------------------------------------------------------
# In-kernel math helpers (plain jnp on 2-D tiles).
# ---------------------------------------------------------------------------
def _layernorm(x, g, b):
    # g, b kept 2-D (1, E): broadcast in-vreg, no 1-D relayouts.
    mu = jnp.mean(x, axis=-1, keepdims=True)
    xc = x - mu
    var = jnp.mean(xc * xc, axis=-1, keepdims=True)
    return xc * jax.lax.rsqrt(var + LN_EPS) * g + b


def _attention(q_in, kv_in, wqkv, bqkv, wo, bo, *, fused_qkv):
    """PyTorch-style MultiheadAttention on one batch element (packed/pre-transposed weights).

    q_in: (Sq, E), kv_in: (Skv, E)
    wqkv: (E, 3E) = in_proj_weight.T with the Q block (and bias) pre-scaled by 1/sqrt(DH)
    bqkv: (1, 3E);  wo: (E, E) = out_proj.weight.T;  bo: (1, E)
    """
    if fused_qkv:
        # self-attention: single (S,E) @ (E,3E) projection
        qkv = jnp.dot(q_in, wqkv, preferred_element_type=jnp.float32) + bqkv
        q, k, v = qkv[:, 0:E], qkv[:, E:2 * E], qkv[:, 2 * E:3 * E]
    else:
        # cross-attention: q-proj + fused KV proj
        q = jnp.dot(q_in, wqkv[:, 0:E], preferred_element_type=jnp.float32) + bqkv[:, 0:E]
        kv = jnp.dot(kv_in, wqkv[:, E:3 * E], preferred_element_type=jnp.float32) + bqkv[:, E:3 * E]
        k, v = kv[:, 0:E], kv[:, E:2 * E]

    Sq = q_in.shape[0]
    # Scores for all heads stacked along the sublane axis -> (H*Sq, Skv); 'qd,kd->qk' is an
    # nt contraction (no explicit K transpose) and one batched softmax covers every head.
    s = jnp.concatenate(
        [jnp.einsum("qd,kd->qk",
                    q[:, h * DH:(h + 1) * DH], k[:, h * DH:(h + 1) * DH],
                    preferred_element_type=jnp.float32)
         for h in range(H)], axis=0)
    s = s - jnp.max(s, axis=-1, keepdims=True)
    p = jnp.exp(s)
    p = p * pl.reciprocal(jnp.sum(p, axis=-1, keepdims=True), approx=True)
    # Per-head context, concatenated back to (Sq, E), then ONE output projection.
    ctx = jnp.concatenate(
        [jnp.dot(p[h * Sq:(h + 1) * Sq, :], v[:, h * DH:(h + 1) * DH],
                 preferred_element_type=jnp.float32)
         for h in range(H)], axis=1)
    return jnp.dot(ctx, wo, preferred_element_type=jnp.float32) + bo


# ---------------------------------------------------------------------------
# Pallas kernel: full transformer block for ONE batch element per grid step.
# ---------------------------------------------------------------------------
def transformer_block_kernel(x_ref, ctx_ref, p_ref, o_ref):
    x = x_ref[0].astype(jnp.float32)      # (S, E)
    c = ctx_ref[0].astype(jnp.float32)    # (SC, E)

    def vec(i, width):
        r = R_VEC + i
        return p_ref[r:r + 1, 0:width]    # (1, width), kept 2-D

    sa_wqkv = p_ref[R_SA_WQKV:R_SA_WQKV + E, 0:3 * E]
    ca_wqkv = p_ref[R_CA_WQKV:R_CA_WQKV + E, 0:3 * E]
    sa_wo = p_ref[R_SA_WO:R_SA_WO + E, 0:E]
    ca_wo = p_ref[R_CA_WO:R_CA_WO + E, 0:E]
    w1 = p_ref[R_W1:R_W1 + E, 0:FF]
    w2 = p_ref[R_W2:R_W2 + FF, 0:E]
    sa_bqkv = vec(V_SA_BQKV, 3 * E)
    ca_bqkv = vec(V_CA_BQKV, 3 * E)
    sa_bo = vec(V_SA_BO, E)
    ca_bo = vec(V_CA_BO, E)
    b1 = vec(V_B1, FF)
    b2 = vec(V_B2, E)
    ln1_g, ln1_b = vec(V_LN1G, E), vec(V_LN1B, E)
    ln2_g, ln2_b = vec(V_LN2G, E), vec(V_LN2B, E)
    ln3_g, ln3_b = vec(V_LN3G, E), vec(V_LN3B, E)

    # ---- self-attention + residual + layernorm1 ----
    attn = _attention(x, x, sa_wqkv, sa_bqkv, sa_wo, sa_bo, fused_qkv=True)
    x = _layernorm(x + attn, ln1_g, ln1_b)

    # ---- cross-attention + residual + layernorm2 ----
    xattn = _attention(x, c, ca_wqkv, ca_bqkv, ca_wo, ca_bo, fused_qkv=False)
    x = _layernorm(x + xattn, ln2_g, ln2_b)

    # ---- FFN (Linear -> ReLU -> Linear) + residual + layernorm3 ----
    h = jnp.maximum(jnp.dot(x, w1, preferred_element_type=jnp.float32) + b1, 0.0)
    f = jnp.dot(h, w2, preferred_element_type=jnp.float32) + b2
    x = _layernorm(x + f, ln3_g, ln3_b)

    o_ref[0] = x.astype(o_ref.dtype)


@jax.jit
def transformer_block(x, context, params):
    Bb, Ss, Ee = x.shape
    Sc = context.shape[1]
    slab = pack_params(params)  # single packed f32 parameter buffer -> one DMA

    return pl.pallas_call(
        transformer_block_kernel,
        out_shape=jax.ShapeDtypeStruct((Bb, Ss, Ee), x.dtype),
        grid=(Bb,),
        in_specs=[
            pl.BlockSpec((1, Ss, Ee), lambda b: (b, 0, 0)),
            pl.BlockSpec((1, Sc, Ee), lambda b: (b, 0, 0)),
            # Full-array block with a constant block index: DMA'd once, never re-fetched.
            pl.BlockSpec((SLAB_ROWS, SLAB_COLS), lambda b: (0, 0)),
        ],
        out_specs=pl.BlockSpec((1, Ss, Ee), lambda b: (b, 0, 0)),
        compiler_params=pltpu.CompilerParams(dimension_semantics=("parallel",)),
    )(x, context, slab)


# ---------------------------------------------------------------------------
# Pure-JAX reference (same math as the PyTorch module, exact softmax division).
# ---------------------------------------------------------------------------
def _mha_ref(q_in, kv_in, w_qkv, b_qkv, w_o, b_o):
    q = jnp.dot(q_in, w_qkv[0:E, :].T) + b_qkv[0, 0:E]
    k = jnp.dot(kv_in, w_qkv[E:2 * E, :].T) + b_qkv[0, E:2 * E]
    v = jnp.dot(kv_in, w_qkv[2 * E:3 * E, :].T) + b_qkv[0, 2 * E:3 * E]
    scale = 1.0 / math.sqrt(DH)
    outs = []
    for h in range(H):
        sl = slice(h * DH, (h + 1) * DH)
        s = jnp.dot(q[:, sl], k[:, sl].T) * scale
        s = s - jnp.max(s, axis=-1, keepdims=True)
        p = jnp.exp(s)
        p = p / jnp.sum(p, axis=-1, keepdims=True)
        outs.append(jnp.dot(p, v[:, sl]))
    ctx = jnp.concatenate(outs, axis=1)
    return jnp.dot(ctx, w_o.T) + b_o[0]


def reference(x, context, p):
    def one(xb, cb):
        xb = xb.astype(jnp.float32)
        cb = cb.astype(jnp.float32)
        a = _mha_ref(xb, xb, p["sa_wqkv"], p["sa_bqkv"], p["sa_wo"], p["sa_bo"])
        xb = _layernorm(xb + a, p["ln1_g"], p["ln1_b"])
        a = _mha_ref(xb, cb, p["ca_wqkv"], p["ca_bqkv"], p["ca_wo"], p["ca_bo"])
        xb = _layernorm(xb + a, p["ln2_g"], p["ln2_b"])
        h = jnp.maximum(jnp.dot(xb, p["w1"].T) + p["b1"][0], 0.0)
        f = jnp.dot(h, p["w2"].T) + p["b2"][0]
        return _layernorm(xb + f, p["ln3_g"], p["ln3_b"])
    return jax.vmap(one)(x, context)


def init_params(key):
    ks = jax.random.split(key, 12)
    n = lambda k, shape, s=0.05: (s * jax.random.normal(k, shape)).astype(jnp.float32)
    return {
        # self-attention (in_proj stacked [Wq; Wk; Wv], out_proj)
        "sa_wqkv": n(ks[0], (3 * E, E)), "sa_bqkv": n(ks[1], (1, 3 * E)),
        "sa_wo": n(ks[2], (E, E)),       "sa_bo": n(ks[3], (1, E)),
        # cross-attention
        "ca_wqkv": n(ks[4], (3 * E, E)), "ca_bqkv": n(ks[5], (1, 3 * E)),
        "ca_wo": n(ks[6], (E, E)),       "ca_bo": n(ks[7], (1, E)),
        # FFN
        "w1": n(ks[8], (FF, E)), "b1": n(ks[9], (1, FF)),
        "w2": n(ks[10], (E, FF)), "b2": n(ks[11], (1, E)),
        # layernorms (PyTorch default init: weight=1, bias=0)
        "ln1_g": jnp.ones((1, E), jnp.float32), "ln1_b": jnp.zeros((1, E), jnp.float32),
        "ln2_g": jnp.ones((1, E), jnp.float32), "ln2_b": jnp.zeros((1, E), jnp.float32),
        "ln3_g": jnp.ones((1, E), jnp.float32), "ln3_b": jnp.zeros((1, E), jnp.float32),
    }


if __name__ == "__main__":
    key = jax.random.PRNGKey(0)
    kx, kc, kp = jax.random.split(key, 3)
    x = jax.random.normal(kx, (B, S, E), dtype=jnp.float32)
    context = jax.random.normal(kc, (B, SC, E), dtype=jnp.float32)
    params = init_params(kp)

    out = transformer_block(x, context, params)
    out = jax.block_until_ready(out)

    ref = jax.block_until_ready(reference(x, context, params))
    assert out.shape == (B, S, E)
    # Tolerance slightly loosened vs. 1e-4 because the softmax denominator uses the
    # EUP approximate reciprocal (pl.reciprocal(..., approx=True)).
    err = float(jnp.max(jnp.abs(out - ref)))
    assert jnp.allclose(out, ref, atol=2e-3, rtol=2e-3), err

    print("KERNEL_OK")
</pallas_src>

<mosaic_0001>
module attributes {stable_mosaic.version = 11 : i64} {
  func.func @transformer_block_kernel(%arg0: i32, %arg1: memref<1x8x32xf32, #tpu.memory_space<vmem>>, %arg2: memref<1x8x32xf32, #tpu.memory_space<vmem>>, %arg3: memref<240x128xf32, #tpu.memory_space<vmem>>, %arg4: memref<1x8x32xf32, #tpu.memory_space<vmem>>) attributes {dimension_semantics = [#tpu.dimension_semantics<parallel>], iteration_bounds = array<i64: 2>, scalar_prefetch = 0 : i64, scratch_operands = 0 : i64, tpu.core_type = #tpu.core_type<tc>, window_params = [{transform_indices = @transform_0, window_bounds = array<i64: 1, 8, 32>}, {transform_indices = @transform_1, window_bounds = array<i64: 1, 8, 32>}, {pipeline_mode = #tpu.pipeline_mode<synchronous>, transform_indices = @transform_2, window_bounds = array<i64: 240, 128>}, {transform_indices = @transform_3, window_bounds = array<i64: 1, 8, 32>}]} {
    %c0 = arith.constant 0 : index
    %c0_0 = arith.constant 0 : index
    %c0_1 = arith.constant 0 : index
    %0 = vector.load %arg1[%c0, %c0_0, %c0_1] : memref<1x8x32xf32, #tpu.memory_space<vmem>>, vector<1x8x32xf32>
    %1 = vector.shape_cast %0 : vector<1x8x32xf32> to vector<8x32xf32>
    %c0_2 = arith.constant 0 : index
    %c0_3 = arith.constant 0 : index
    %c0_4 = arith.constant 0 : index
    %2 = vector.load %arg2[%c0_2, %c0_3, %c0_4] : memref<1x8x32xf32, #tpu.memory_space<vmem>>, vector<1x8x32xf32>
    %3 = vector.shape_cast %2 : vector<1x8x32xf32> to vector<8x32xf32>
    %c0_5 = arith.constant 0 : index
    %c0_6 = arith.constant 0 : index
    %4 = vector.load %arg3[%c0_5, %c0_6] : memref<240x128xf32, #tpu.memory_space<vmem>>, vector<32x96xf32>
    %c32 = arith.constant 32 : index
    %c0_7 = arith.constant 0 : index
    %5 = vector.load %arg3[%c32, %c0_7] : memref<240x128xf32, #tpu.memory_space<vmem>>, vector<32x96xf32>
    %c64 = arith.constant 64 : index
    %c0_8 = arith.constant 0 : index
    %6 = vector.load %arg3[%c64, %c0_8] : memref<240x128xf32, #tpu.memory_space<vmem>>, vector<32x32xf32>
    %c96 = arith.constant 96 : index
    %c0_9 = arith.constant 0 : index
    %7 = vector.load %arg3[%c96, %c0_9] : memref<240x128xf32, #tpu.memory_space<vmem>>, vector<32x32xf32>
    %c128 = arith.constant 128 : index
    %c0_10 = arith.constant 0 : index
    %8 = vector.load %arg3[%c128, %c0_10] : memref<240x128xf32, #tpu.memory_space<vmem>>, vector<32x64xf32>
    %c160 = arith.constant 160 : index
    %c0_11 = arith.constant 0 : index
    %9 = vector.load %arg3[%c160, %c0_11] : memref<240x128xf32, #tpu.memory_space<vmem>>, vector<64x32xf32>
    %c224 = arith.constant 224 : index
    %c0_12 = arith.constant 0 : index
    %10 = vector.load %arg3[%c224, %c0_12] : memref<240x128xf32, #tpu.memory_space<vmem>>, vector<1x96xf32>
    %c225 = arith.constant 225 : index
    %c0_13 = arith.constant 0 : index
    %11 = vector.load %arg3[%c225, %c0_13] : memref<240x128xf32, #tpu.memory_space<vmem>>, vector<1x96xf32>
    %c226 = arith.constant 226 : index
    %c0_14 = arith.constant 0 : index
    %12 = vector.load %arg3[%c226, %c0_14] : memref<240x128xf32, #tpu.memory_space<vmem>>, vector<1x32xf32>
    %c227 = arith.constant 227 : index
    %c0_15 = arith.constant 0 : index
    %13 = vector.load %arg3[%c227, %c0_15] : memref<240x128xf32, #tpu.memory_space<vmem>>, vector<1x32xf32>
    %c228 = arith.constant 228 : index
    %c0_16 = arith.constant 0 : index
    %14 = vector.load %arg3[%c228, %c0_16] : memref<240x128xf32, #tpu.memory_space<vmem>>, vector<1x64xf32>
    %c229 = arith.constant 229 : index
    %c0_17 = arith.constant 0 : index
    %15 = vector.load %arg3[%c229, %c0_17] : memref<240x128xf32, #tpu.memory_space<vmem>>, vector<1x32xf32>
    %c230 = arith.constant 230 : index
    %c0_18 = arith.constant 0 : index
    %16 = vector.load %arg3[%c230, %c0_18] : memref<240x128xf32, #tpu.memory_space<vmem>>, vector<1x32xf32>
    %c231 = arith.constant 231 : index
    %c0_19 = arith.constant 0 : index
    %17 = vector.load %arg3[%c231, %c0_19] : memref<240x128xf32, #tpu.memory_space<vmem>>, vector<1x32xf32>
    %c232 = arith.constant 232 : index
    %c0_20 = arith.constant 0 : index
    %18 = vector.load %arg3[%c232, %c0_20] : memref<240x128xf32, #tpu.memory_space<vmem>>, vector<1x32xf32>
    %c233 = arith.constant 233 : index
    %c0_21 = arith.constant 0 : index
    %19 = vector.load %arg3[%c233, %c0_21] : memref<240x128xf32, #tpu.memory_space<vmem>>, vector<1x32xf32>
    %c234 = arith.constant 234 : index
    %c0_22 = arith.constant 0 : index
    %20 = vector.load %arg3[%c234, %c0_22] : memref<240x128xf32, #tpu.memory_space<vmem>>, vector<1x32xf32>
    %c235 = arith.constant 235 : index
    %c0_23 = arith.constant 0 : index
    %21 = vector.load %arg3[%c235, %c0_23] : memref<240x128xf32, #tpu.memory_space<vmem>>, vector<1x32xf32>
    %cst = arith.constant dense<0.000000e+00> : vector<8x96xf32>
    %22 = tpu.matmul %1, %4, %cst {dimension_numbers = #tpu.dot_dimension_numbers<[1], [0], [0], [1], [0, 0, 1, 1], [], []>} : vector<8x32xf32>, vector<32x96xf32>, vector<8x96xf32> -> vector<8x96xf32>
    %23 = vector.broadcast %10 : vector<1x96xf32> to vector<8x96xf32>
    %24 = arith.addf %22, %23 : vector<8x96xf32>
    %25 = vector.extract_strided_slice %24 {offsets = [0, 0], sizes = [8, 32], strides = [1, 1]} : vector<8x96xf32> to vector<8x32xf32>
    %26 = vector.extract_strided_slice %24 {offsets = [0, 32], sizes = [8, 32], strides = [1, 1]} : vector<8x96xf32> to vector<8x32xf32>
    %27 = vector.extract_strided_slice %24 {offsets = [0, 64], sizes = [8, 32], strides = [1, 1]} : vector<8x96xf32> to vector<8x32xf32>
    %28 = vector.extract_strided_slice %25 {offsets = [0, 0], sizes = [8, 8], strides = [1, 1]} : vector<8x32xf32> to vector<8x8xf32>
    %29 = vector.extract_strided_slice %26 {offsets = [0, 0], sizes = [8, 8], strides = [1, 1]} : vector<8x32xf32> to vector<8x8xf32>
    "tpu.trace_start"() <{level = 10 : i32, message = "qd,kd->qk"}> : () -> ()
    %cst_24 = arith.constant dense<0.000000e+00> : vector<8x8xf32>
    %30 = tpu.matmul %28, %29, %cst_24 {dimension_numbers = #tpu.dot_dimension_numbers<[1], [1], [0], [0], [0, 0, 1, 0], [], []>} : vector<8x8xf32>, vector<8x8xf32>, vector<8x8xf32> -> vector<8x8xf32>
    "tpu.trace_stop"() : () -> ()
    %31 = vector.extract_strided_slice %25 {offsets = [0, 8], sizes = [8, 8], strides = [1, 1]} : vector<8x32xf32> to vector<8x8xf32>
    %32 = vector.extract_strided_slice %26 {offsets = [0, 8], sizes = [8, 8], strides = [1, 1]} : vector<8x32xf32> to vector<8x8xf32>
    "tpu.trace_start"() <{level = 10 : i32, message = "qd,kd->qk"}> : () -> ()
    %cst_25 = arith.constant dense<0.000000e+00> : vector<8x8xf32>
    %33 = tpu.matmul %31, %32, %cst_25 {dimension_numbers = #tpu.dot_dimension_numbers<[1], [1], [0], [0], [0, 0, 1, 0], [], []>} : vector<8x8xf32>, vector<8x8xf32>, vector<8x8xf32> -> vector<8x8xf32>
    "tpu.trace_stop"() : () -> ()
    %34 = vector.extract_strided_slice %25 {offsets = [0, 16], sizes = [8, 8], strides = [1, 1]} : vector<8x32xf32> to vector<8x8xf32>
    %35 = vector.extract_strided_slice %26 {offsets = [0, 16], sizes = [8, 8], strides = [1, 1]} : vector<8x32xf32> to vector<8x8xf32>
    "tpu.trace_start"() <{level = 10 : i32, message = "qd,kd->qk"}> : () -> ()
    %cst_26 = arith.constant dense<0.000000e+00> : vector<8x8xf32>
    %36 = tpu.matmul %34, %35, %cst_26 {dimension_numbers = #tpu.dot_dimension_numbers<[1], [1], [0], [0], [0, 0, 1, 0], [], []>} : vector<8x8xf32>, vector<8x8xf32>, vector<8x8xf32> -> vector<8x8xf32>
    "tpu.trace_stop"() : () -> ()
    %37 = vector.extract_strided_slice %25 {offsets = [0, 24], sizes = [8, 8], strides = [1, 1]} : vector<8x32xf32> to vector<8x8xf32>
    %38 = vector.extract_strided_slice %26 {offsets = [0, 24], sizes = [8, 8], strides = [1, 1]} : vector<8x32xf32> to vector<8x8xf32>
    "tpu.trace_start"() <{level = 10 : i32, message = "qd,kd->qk"}> : () -> ()
    %cst_27 = arith.constant dense<0.000000e+00> : vector<8x8xf32>
    %39 = tpu.matmul %37, %38, %cst_27 {dimension_numbers = #tpu.dot_dimension_numbers<[1], [1], [0], [0], [0, 0, 1, 0], [], []>} : vector<8x8xf32>, vector<8x8xf32>, vector<8x8xf32> -> vector<8x8xf32>
    "tpu.trace_stop"() : () -> ()
    %40 = tpu.concatenate %30, %33, %36, %39 in 0 : vector<8x8xf32>, vector<8x8xf32>, vector<8x8xf32>, vector<8x8xf32> -> vector<32x8xf32>
    %cst_28 = arith.constant dense<0xFF800000> : vector<32xf32>
    %41 = vector.multi_reduction <maximumf>, %40, %cst_28 [1] : vector<32x8xf32> to vector<32xf32>
    %42 = vector.shape_cast %41 : vector<32xf32> to vector<32x1xf32>
    %43 = vector.broadcast %42 : vector<32x1xf32> to vector<32x8xf32>
    %44 = arith.subf %40, %43 : vector<32x8xf32>
    %45 = math.exp %44 : vector<32x8xf32>
    %cst_29 = arith.constant dense<0.000000e+00> : vector<32xf32>
    %46 = vector.multi_reduction <add>, %45, %cst_29 [1] : vector<32x8xf32> to vector<32xf32>
    %47 = vector.shape_cast %46 : vector<32xf32> to vector<32x1xf32>
    %48 = tpu.reciprocal %47 {approx = true} : vector<32x1xf32> -> vector<32x1xf32>
    %49 = vector.broadcast %48 : vector<32x1xf32> to vector<32x8xf32>
    %50 = arith.mulf %45, %49 : vector<32x8xf32>
    %51 = vector.extract_strided_slice %50 {offsets = [0, 0], sizes = [8, 8], strides = [1, 1]} : vector<32x8xf32> to vector<8x8xf32>
    %52 = vector.extract_strided_slice %27 {offsets = [0, 0], sizes = [8, 8], strides = [1, 1]} : vector<8x32xf32> to vector<8x8xf32>
    %cst_30 = arith.constant dense<0.000000e+00> : vector<8x8xf32>
    %53 = tpu.matmul %51, %52, %cst_30 {dimension_numbers = #tpu.dot_dimension_numbers<[1], [0], [0], [1], [0, 0, 1, 1], [], []>} : vector<8x8xf32>, vector<8x8xf32>, vector<8x8xf32> -> vector<8x8xf32>
    %54 = vector.extract_strided_slice %50 {offsets = [8, 0], sizes = [8, 8], strides = [1, 1]} : vector<32x8xf32> to vector<8x8xf32>
    %55 = vector.extract_strided_slice %27 {offsets = [0, 8], sizes = [8, 8], strides = [1, 1]} : vector<8x32xf32> to vector<8x8xf32>
    %cst_31 = arith.constant dense<0.000000e+00> : vector<8x8xf32>
    %56 = tpu.matmul %54, %55, %cst_31 {dimension_numbers = #tpu.dot_dimension_numbers<[1], [0], [0], [1], [0, 0, 1, 1], [], []>} : vector<8x8xf32>, vector<8x8xf32>, vector<8x8xf32> -> vector<8x8xf32>
    %57 = vector.extract_strided_slice %50 {offsets = [16, 0], sizes = [8, 8], strides = [1, 1]} : vector<32x8xf32> to vector<8x8xf32>
    %58 = vector.extract_strided_slice %27 {offsets = [0, 16], sizes = [8, 8], strides = [1, 1]} : vector<8x32xf32> to vector<8x8xf32>
    %cst_32 = arith.constant dense<0.000000e+00> : vector<8x8xf32>
    %59 = tpu.matmul %57, %58, %cst_32 {dimension_numbers = #tpu.dot_dimension_numbers<[1], [0], [0], [1], [0, 0, 1, 1], [], []>} : vector<8x8xf32>, vector<8x8xf32>, vector<8x8xf32> -> vector<8x8xf32>
    %60 = vector.extract_strided_slice %50 {offsets = [24, 0], sizes = [8, 8], strides = [1, 1]} : vector<32x8xf32> to vector<8x8xf32>
    %61 = vector.extract_strided_slice %27 {offsets = [0, 24], sizes = [8, 8], strides = [1, 1]} : vector<8x32xf32> to vector<8x8xf32>
    %cst_33 = arith.constant dense<0.000000e+00> : vector<8x8xf32>
    %62 = tpu.matmul %60, %61, %cst_33 {dimension_numbers = #tpu.dot_dimension_numbers<[1], [0], [0], [1], [0, 0, 1, 1], [], []>} : vector<8x8xf32>, vector<8x8xf32>, vector<8x8xf32> -> vector<8x8xf32>
    %63 = tpu.concatenate %53, %56, %59, %62 in 1 : vector<8x8xf32>, vector<8x8xf32>, vector<8x8xf32>, vector<8x8xf32> -> vector<8x32xf32>
    %cst_34 = arith.constant dense<0.000000e+00> : vector<8x32xf32>
    %64 = tpu.matmul %63, %6, %cst_34 {dimension_numbers = #tpu.dot_dimension_numbers<[1], [0], [0], [1], [0, 0, 1, 1], [], []>} : vector<8x32xf32>, vector<32x32xf32>, vector<8x32xf32> -> vector<8x32xf32>
    %65 = vector.broadcast %12 : vector<1x32xf32> to vector<8x32xf32>
    %66 = arith.addf %64, %65 : vector<8x32xf32>
    %67 = arith.addf %1, %66 : vector<8x32xf32>
    %cst_35 = arith.constant dense<0.000000e+00> : vector<8xf32>
    %68 = vector.multi_reduction <add>, %67, %cst_35 [1] : vector<8x32xf32> to vector<8xf32>
    %69 = vector.shape_cast %68 : vector<8xf32> to vector<8x1xf32>
    %cst_36 = arith.constant 3.200000e+01 : f32
    %70 = vector.broadcast %cst_36 : f32 to vector<8x1xf32>
    %71 = arith.divf %69, %70 : vector<8x1xf32>
    %72 = vector.broadcast %71 : vector<8x1xf32> to vector<8x32xf32>
    %73 = arith.subf %67, %72 : vector<8x32xf32>
    %74 = arith.mulf %73, %73 : vector<8x32xf32>
    %cst_37 = arith.constant dense<0.000000e+00> : vector<8xf32>
    %75 = vector.multi_reduction <add>, %74, %cst_37 [1] : vector<8x32xf32> to vector<8xf32>
    %76 = vector.shape_cast %75 : vector<8xf32> to vector<8x1xf32>
    %cst_38 = arith.constant 3.200000e+01 : f32
    %77 = vector.broadcast %cst_38 : f32 to vector<8x1xf32>
    %78 = arith.divf %76, %77 : vector<8x1xf32>
    %cst_39 = arith.constant 9.99999974E-6 : f32
    %79 = vector.broadcast %cst_39 : f32 to vector<8x1xf32>
    %80 = arith.addf %78, %79 : vector<8x1xf32>
    %81 = math.rsqrt %80 : vector<8x1xf32>
    %82 = vector.broadcast %81 : vector<8x1xf32> to vector<8x32xf32>
    %83 = arith.mulf %73, %82 : vector<8x32xf32>
    %84 = vector.broadcast %16 : vector<1x32xf32> to vector<8x32xf32>
    %85 = arith.mulf %83, %84 : vector<8x32xf32>
    %86 = vector.broadcast %17 : vector<1x32xf32> to vector<8x32xf32>
    %87 = arith.addf %85, %86 : vector<8x32xf32>
    %88 = vector.extract_strided_slice %5 {offsets = [0, 0], sizes = [32, 32], strides = [1, 1]} : vector<32x96xf32> to vector<32x32xf32>
    %cst_40 = arith.constant dense<0.000000e+00> : vector<8x32xf32>
    %89 = tpu.matmul %87, %88, %cst_40 {dimension_numbers = #tpu.dot_dimension_numbers<[1], [0], [0], [1], [0, 0, 1, 1], [], []>} : vector<8x32xf32>, vector<32x32xf32>, vector<8x32xf32> -> vector<8x32xf32>
    %90 = vector.extract_strided_slice %11 {offsets = [0, 0], sizes = [1, 32], strides = [1, 1]} : vector<1x96xf32> to vector<1x32xf32>
    %91 = vector.broadcast %90 : vector<1x32xf32> to vector<8x32xf32>
    %92 = arith.addf %89, %91 : vector<8x32xf32>
    %93 = vector.extract_strided_slice %5 {offsets = [0, 32], sizes = [32, 64], strides = [1, 1]} : vector<32x96xf32> to vector<32x64xf32>
    %cst_41 = arith.constant dense<0.000000e+00> : vector<8x64xf32>
    %94 = tpu.matmul %3, %93, %cst_41 {dimension_numbers = #tpu.dot_dimension_numbers<[1], [0], [0], [1], [0, 0, 1, 1], [], []>} : vector<8x32xf32>, vector<32x64xf32>, vector<8x64xf32> -> vector<8x64xf32>
    %95 = vector.extract_strided_slice %11 {offsets = [0, 32], sizes = [1, 64], strides = [1, 1]} : vector<1x96xf32> to vector<1x64xf32>
    %96 = vector.broadcast %95 : vector<1x64xf32> to vector<8x64xf32>
    %97 = arith.addf %94, %96 : vector<8x64xf32>
    %98 = vector.extract_strided_slice %97 {offsets = [0, 0], sizes = [8, 32], strides = [1, 1]} : vector<8x64xf32> to vector<8x32xf32>
    %99 = vector.extract_strided_slice %97 {offsets = [0, 32], sizes = [8, 32], strides = [1, 1]} : vector<8x64xf32> to vector<8x32xf32>
    %100 = vector.extract_strided_slice %92 {offsets = [0, 0], sizes = [8, 8], strides = [1, 1]} : vector<8x32xf32> to vector<8x8xf32>
    %101 = vector.extract_strided_slice %98 {offsets = [0, 0], sizes = [8, 8], strides = [1, 1]} : vector<8x32xf32> to vector<8x8xf32>
    "tpu.trace_start"() <{level = 10 : i32, message = "qd,kd->qk"}> : () -> ()
    %cst_42 = arith.constant dense<0.000000e+00> : vector<8x8xf32>
    %102 = tpu.matmul %100, %101, %cst_42 {dimension_numbers = #tpu.dot_dimension_numbers<[1], [1], [0], [0], [0, 0, 1, 0], [], []>} : vector<8x8xf32>, vector<8x8xf32>, vector<8x8xf32> -> vector<8x8xf32>
    "tpu.trace_stop"() : () -> ()
    %103 = vector.extract_strided_slice %92 {offsets = [0, 8], sizes = [8, 8], strides = [1, 1]} : vector<8x32xf32> to vector<8x8xf32>
    %104 = vector.extract_strided_slice %98 {offsets = [0, 8], sizes = [8, 8], strides = [1, 1]} : vector<8x32xf32> to vector<8x8xf32>
    "tpu.trace_start"() <{level = 10 : i32, message = "qd,kd->qk"}> : () -> ()
    %cst_43 = arith.constant dense<0.000000e+00> : vector<8x8xf32>
    %105 = tpu.matmul %103, %104, %cst_43 {dimension_numbers = #tpu.dot_dimension_numbers<[1], [1], [0], [0], [0, 0, 1, 0], [], []>} : vector<8x8xf32>, vector<8x8xf32>, vector<8x8xf32> -> vector<8x8xf32>
    "tpu.trace_stop"() : () -> ()
    %106 = vector.extract_strided_slice %92 {offsets = [0, 16], sizes = [8, 8], strides = [1, 1]} : vector<8x32xf32> to vector<8x8xf32>
    %107 = vector.extract_strided_slice %98 {offsets = [0, 16], sizes = [8, 8], strides = [1, 1]} : vector<8x32xf32> to vector<8x8xf32>
    "tpu.trace_start"() <{level = 10 : i32, message = "qd,kd->qk"}> : () -> ()
    %cst_44 = arith.constant dense<0.000000e+00> : vector<8x8xf32>
    %108 = tpu.matmul %106, %107, %cst_44 {dimension_numbers = #tpu.dot_dimension_numbers<[1], [1], [0], [0], [0, 0, 1, 0], [], []>} : vector<8x8xf32>, vector<8x8xf32>, vector<8x8xf32> -> vector<8x8xf32>
    "tpu.trace_stop"() : () -> ()
    %109 = vector.extract_strided_slice %92 {offsets = [0, 24], sizes = [8, 8], strides = [1, 1]} : vector<8x32xf32> to vector<8x8xf32>
    %110 = vector.extract_strided_slice %98 {offsets = [0, 24], sizes = [8, 8], strides = [1, 1]} : vector<8x32xf32> to vector<8x8xf32>
    "tpu.trace_start"() <{level = 10 : i32, message = "qd,kd->qk"}> : () -> ()
    %cst_45 = arith.constant dense<0.000000e+00> : vector<8x8xf32>
    %111 = tpu.matmul %109, %110, %cst_45 {dimension_numbers = #tpu.dot_dimension_numbers<[1], [1], [0], [0], [0, 0, 1, 0], [], []>} : vector<8x8xf32>, vector<8x8xf32>, vector<8x8xf32> -> vector<8x8xf32>
    "tpu.trace_stop"() : () -> ()
    %112 = tpu.concatenate %102, %105, %108, %111 in 0 : vector<8x8xf32>, vector<8x8xf32>, vector<8x8xf32>, vector<8x8xf32> -> vector<32x8xf32>
    %cst_46 = arith.constant dense<0xFF800000> : vector<32xf32>
    %113 = vector.multi_reduction <maximumf>, %112, %cst_46 [1] : vector<32x8xf32> to vector<32xf32>
    %114 = vector.shape_cast %113 : vector<32xf32> to vector<32x1xf32>
    %115 = vector.broadcast %114 : vector<32x1xf32> to vector<32x8xf32>
    %116 = arith.subf %112, %115 : vector<32x8xf32>
    %117 = math.exp %116 : vector<32x8xf32>
    %cst_47 = arith.constant dense<0.000000e+00> : vector<32xf32>
    %118 = vector.multi_reduction <add>, %117, %cst_47 [1] : vector<32x8xf32> to vector<32xf32>
    %119 = vector.shape_cast %118 : vector<32xf32> to vector<32x1xf32>
    %120 = tpu.reciprocal %119 {approx = true} : vector<32x1xf32> -> vector<32x1xf32>
    %121 = vector.broadcast %120 : vector<32x1xf32> to vector<32x8xf32>
    %122 = arith.mulf %117, %121 : vector<32x8xf32>
    %123 = vector.extract_strided_slice %122 {offsets = [0, 0], sizes = [8, 8], strides = [1, 1]} : vector<32x8xf32> to vector<8x8xf32>
    %124 = vector.extract_strided_slice %99 {offsets = [0, 0], sizes = [8, 8], strides = [1, 1]} : vector<8x32xf32> to vector<8x8xf32>
    %cst_48 = arith.constant dense<0.000000e+00> : vector<8x8xf32>
    %125 = tpu.matmul %123, %124, %cst_48 {dimension_numbers = #tpu.dot_dimension_numbers<[1], [0], [0], [1], [0, 0, 1, 1], [], []>} : vector<8x8xf32>, vector<8x8xf32>, vector<8x8xf32> -> vector<8x8xf32>
    %126 = vector.extract_strided_slice %122 {offsets = [8, 0], sizes = [8, 8], strides = [1, 1]} : vector<32x8xf32> to vector<8x8xf32>
    %127 = vector.extract_strided_slice %99 {offsets = [0, 8], sizes = [8, 8], strides = [1, 1]} : vector<8x32xf32> to vector<8x8xf32>
    %cst_49 = arith.constant dense<0.000000e+00> : vector<8x8xf32>
    %128 = tpu.matmul %126, %127, %cst_49 {dimension_numbers = #tpu.dot_dimension_numbers<[1], [0], [0], [1], [0, 0, 1, 1], [], []>} : vector<8x8xf32>, vector<8x8xf32>, vector<8x8xf32> -> vector<8x8xf32>
    %129 = vector.extract_strided_slice %122 {offsets = [16, 0], sizes = [8, 8], strides = [1, 1]} : vector<32x8xf32> to vector<8x8xf32>
    %130 = vector.extract_strided_slice %99 {offsets = [0, 16], sizes = [8, 8], strides = [1, 1]} : vector<8x32xf32> to vector<8x8xf32>
    %cst_50 = arith.constant dense<0.000000e+00> : vector<8x8xf32>
    %131 = tpu.matmul %129, %130, %cst_50 {dimension_numbers = #tpu.dot_dimension_numbers<[1], [0], [0], [1], [0, 0, 1, 1], [], []>} : vector<8x8xf32>, vector<8x8xf32>, vector<8x8xf32> -> vector<8x8xf32>
    %132 = vector.extract_strided_slice %122 {offsets = [24, 0], sizes = [8, 8], strides = [1, 1]} : vector<32x8xf32> to vector<8x8xf32>
    %133 = vector.extract_strided_slice %99 {offsets = [0, 24], sizes = [8, 8], strides = [1, 1]} : vector<8x32xf32> to vector<8x8xf32>
    %cst_51 = arith.constant dense<0.000000e+00> : vector<8x8xf32>
    %134 = tpu.matmul %132, %133, %cst_51 {dimension_numbers = #tpu.dot_dimension_numbers<[1], [0], [0], [1], [0, 0, 1, 1], [], []>} : vector<8x8xf32>, vector<8x8xf32>, vector<8x8xf32> -> vector<8x8xf32>
    %135 = tpu.concatenate %125, %128, %131, %134 in 1 : vector<8x8xf32>, vector<8x8xf32>, vector<8x8xf32>, vector<8x8xf32> -> vector<8x32xf32>
    %cst_52 = arith.constant dense<0.000000e+00> : vector<8x32xf32>
    %136 = tpu.matmul %135, %7, %cst_52 {dimension_numbers = #tpu.dot_dimension_numbers<[1], [0], [0], [1], [0, 0, 1, 1], [], []>} : vector<8x32xf32>, vector<32x32xf32>, vector<8x32xf32> -> vector<8x32xf32>
    %137 = vector.broadcast %13 : vector<1x32xf32> to vector<8x32xf32>
    %138 = arith.addf %136, %137 : vector<8x32xf32>
    %139 = arith.addf %87, %138 : vector<8x32xf32>
    %cst_53 = arith.constant dense<0.000000e+00> : vector<8xf32>
    %140 = vector.multi_reduction <add>, %139, %cst_53 [1] : vector<8x32xf32> to vector<8xf32>
    %141 = vector.shape_cast %140 : vector<8xf32> to vector<8x1xf32>
    %cst_54 = arith.constant 3.200000e+01 : f32
    %142 = vector.broadcast %cst_54 : f32 to vector<8x1xf32>
    %143 = arith.divf %141, %142 : vector<8x1xf32>
    %144 = vector.broadcast %143 : vector<8x1xf32> to vector<8x32xf32>
    %145 = arith.subf %139, %144 : vector<8x32xf32>
    %146 = arith.mulf %145, %145 : vector<8x32xf32>
    %cst_55 = arith.constant dense<0.000000e+00> : vector<8xf32>
    %147 = vector.multi_reduction <add>, %146, %cst_55 [1] : vector<8x32xf32> to vector<8xf32>
    %148 = vector.shape_cast %147 : vector<8xf32> to vector<8x1xf32>
    %cst_56 = arith.constant 3.200000e+01 : f32
    %149 = vector.broadcast %cst_56 : f32 to vector<8x1xf32>
    %150 = arith.divf %148, %149 : vector<8x1xf32>
    %cst_57 = arith.constant 9.99999974E-6 : f32
    %151 = vector.broadcast %cst_57 : f32 to vector<8x1xf32>
    %152 = arith.addf %150, %151 : vector<8x1xf32>
    %153 = math.rsqrt %152 : vector<8x1xf32>
    %154 = vector.broadcast %153 : vector<8x1xf32> to vector<8x32xf32>
    %155 = arith.mulf %145, %154 : vector<8x32xf32>
    %156 = vector.broadcast %18 : vector<1x32xf32> to vector<8x32xf32>
    %157 = arith.mulf %155, %156 : vector<8x32xf32>
    %158 = vector.broadcast %19 : vector<1x32xf32> to vector<8x32xf32>
    %159 = arith.addf %157, %158 : vector<8x32xf32>
    %cst_58 = arith.constant dense<0.000000e+00> : vector<8x64xf32>
    %160 = tpu.matmul %159, %8, %cst_58 {dimension_numbers = #tpu.dot_dimension_numbers<[1], [0], [0], [1], [0, 0, 1, 1], [], []>} : vector<8x32xf32>, vector<32x64xf32>, vector<8x64xf32> -> vector<8x64xf32>
    %161 = vector.broadcast %14 : vector<1x64xf32> to vector<8x64xf32>
    %162 = arith.addf %160, %161 : vector<8x64xf32>
    %cst_59 = arith.constant 0.000000e+00 : f32
    %163 = vector.broadcast %cst_59 : f32 to vector<8x64xf32>
    %164 = arith.maximumf %162, %163 : vector<8x64xf32>
    %cst_60 = arith.constant dense<0.000000e+00> : vector<8x32xf32>
    %165 = tpu.matmul %164, %9, %cst_60 {dimension_numbers = #tpu.dot_dimension_numbers<[1], [0], [0], [1], [0, 0, 1, 1], [], []>} : vector<8x64xf32>, vector<64x32xf32>, vector<8x32xf32> -> vector<8x32xf32>
    %166 = vector.broadcast %15 : vector<1x32xf32> to vector<8x32xf32>
    %167 = arith.addf %165, %166 : vector<8x32xf32>
    %168 = arith.addf %159, %167 : vector<8x32xf32>
    %cst_61 = arith.constant dense<0.000000e+00> : vector<8xf32>
    %169 = vector.multi_reduction <add>, %168, %cst_61 [1] : vector<8x32xf32> to vector<8xf32>
    %170 = vector.shape_cast %169 : vector<8xf32> to vector<8x1xf32>
    %cst_62 = arith.constant 3.200000e+01 : f32
    %171 = vector.broadcast %cst_62 : f32 to vector<8x1xf32>
    %172 = arith.divf %170, %171 : vector<8x1xf32>
    %173 = vector.broadcast %172 : vector<8x1xf32> to vector<8x32xf32>
    %174 = arith.subf %168, %173 : vector<8x32xf32>
    %175 = arith.mulf %174, %174 : vector<8x32xf32>
    %cst_63 = arith.constant dense<0.000000e+00> : vector<8xf32>
    %176 = vector.multi_reduction <add>, %175, %cst_63 [1] : vector<8x32xf32> to vector<8xf32>
    %177 = vector.shape_cast %176 : vector<8xf32> to vector<8x1xf32>
    %cst_64 = arith.constant 3.200000e+01 : f32
    %178 = vector.broadcast %cst_64 : f32 to vector<8x1xf32>
    %179 = arith.divf %177, %178 : vector<8x1xf32>
    %cst_65 = arith.constant 9.99999974E-6 : f32
    %180 = vector.broadcast %cst_65 : f32 to vector<8x1xf32>
    %181 = arith.addf %179, %180 : vector<8x1xf32>
    %182 = math.rsqrt %181 : vector<8x1xf32>
    %183 = vector.broadcast %182 : vector<8x1xf32> to vector<8x32xf32>
    %184 = arith.mulf %174, %183 : vector<8x32xf32>
    %185 = vector.broadcast %20 : vector<1x32xf32> to vector<8x32xf32>
    %186 = arith.mulf %184, %185 : vector<8x32xf32>
    %187 = vector.broadcast %21 : vector<1x32xf32> to vector<8x32xf32>
    %188 = arith.addf %186, %187 : vector<8x32xf32>
    %c0_66 = arith.constant 0 : index
    %c0_67 = arith.constant 0 : index
    %c0_68 = arith.constant 0 : index
    %189 = vector.load %arg4[%c0_66, %c0_67, %c0_68] : memref<1x8x32xf32, #tpu.memory_space<vmem>>, vector<1x8x32xf32>
    %190 = vector.shape_cast %189 : vector<1x8x32xf32> to vector<8x32xf32>
    %191 = vector.shape_cast %188 : vector<8x32xf32> to vector<1x8x32xf32>
    tpu.vector_store %arg4[%c0_66, %c0_67, %c0_68], %191 {strides = array<i32>} : memref<1x8x32xf32, #tpu.memory_space<vmem>>, vector<1x8x32xf32>,
    return
  }
  func.func @transform_0(%arg0: i32) -> (i32, i32, i32) {
    %c0_i32 = arith.constant 0 : i32
    %c0_i32_0 = arith.constant 0 : i32
    %c0_i32_1 = arith.constant 0 : i32
    return %arg0, %c0_i32, %c0_i32_0 : i32, i32, i32
  }
  func.func @transform_1(%arg0: i32) -> (i32, i32, i32) {
    %c0_i32 = arith.constant 0 : i32
    %c0_i32_0 = arith.constant 0 : i32
    %c0_i32_1 = arith.constant 0 : i32
    return %arg0, %c0_i32, %c0_i32_0 : i32, i32, i32
  }
  func.func @transform_2(%arg0: i32) -> (i32, i32) {
    %c0_i32 = arith.constant 0 : i32
    %c0_i32_0 = arith.constant 0 : i32
    %c0_i32_1 = arith.constant 0 : i32
    return %c0_i32, %c0_i32_0 : i32, i32
  }
  func.func @transform_3(%arg0: i32) -> (i32, i32, i32) {
    %c0_i32 = arith.constant 0 : i32
    %c0_i32_0 = arith.constant 0 : i32
    %c0_i32_1 = arith.constant 0 : i32
    return %arg0, %c0_i32, %c0_i32_0 : i32, i32, i32
  }
}

</mosaic_0001>

<llo_original>
// kernel: transformer_block.1
$region0: #{transformer_block.1}
  #allocation0 [shape = 'u32[]', space=smem, size = 0x4, offset = 0x4, fixed_abs, tag = 'smem constant byte address 0x4 - core index']
  #allocation1 [shape = 'u32[144,128]{1,0:T(1,128)}', space=vmem, size = 0x12000, scoped, tag = 'internal scratch']
  %s0 = inlined_call_operand.vmem [shape: f32[2,8,32], index: 0, kind: input, shape index: {}]
  %s1 = inlined_call_operand.vmem [shape: f32[2,8,32], index: 1, kind: input, shape index: {}]
  %s2 = inlined_call_operand.vmem [shape: f32[240,128], index: 2, kind: input, shape index: {}]
  %s3 = inlined_call_operand.hbm [shape: f32[2,8,32], index: 3, kind: output, shape index: {}]
  %s4 = sld [smem:[#allocation0]]
  $region45: #{transformer_block.1} parent=0
    _
  %s6 = ssub.s32 1, %s4
  %s7 = scalar_select 0, %s6, %s4
  $region1: #{transformer_block.1} parent=0
    #allocation2 [shape = 'u8[8192]{0}', space=vmem, size = 0x2000, scoped, tag = 'output window, operand 0']
    #allocation3 [shape = 's32[2]{0}', space=sflag, size = 0x8, scoped, tag = 'scoped memory for transformer_block.1']
    %8 = vsyncpa [#allocation3], 0
    %s9 = scalar_lea.sflag [#allocation3], 1
    %10 = vsyncpa %s9, 0
    loop: start=0, step=1, limit=4
    $region2: #{transformer_block.1} parent=1 // loop_pre_header
      _
    $region3: #{transformer_block.1} parent=1 // loop_header
      %s12 = sphi 0, %s16
      %p13 = scmp.ge.s32.totalorder %s12, 4
      %s22 = sphi 0, %s24
      %s25 = sphi 0, %s22
      %s26 = sphi 0, %s25
      %s42 = sphi 0, %s26
      %s48 = sphi 0, %s50
      %s51 = sphi 0, %s48
      %s52 = sphi 0, %s51
      %s68 = sphi 0, %s52
      %s72 = sphi 0, %s72
      %s74 = sphi 0, %s72
      %s75 = sphi 0, %s74
      %s89 = sphi 0, %s75
      %s95 = sphi 0, %s97
      %s98 = sphi 0, %s95
      %s99 = sphi 0, %s98
      %s115 = sphi 0, %s99
    $region4: #{transformer_block.1} parent=1 // loop_header_branch
      %15 = sbr.rel (%p13) target = $region8
    $region5: #{transformer_block.1} parent=1 // loop_body
      %s17 = ssub.s32 %s12, 1
      %s18 = ssub.s32 %s12, 2
      %s19 = sadd.s32 %s12, 1
      %s20 = ssub.s32 %s12, %s19
      %p21 = scmp.eq.s32.totalorder %s20, 0
      %s23 = sadd.s32 %s22, 1
      %s24 = scalar_select %p21, %s22, %s23
      %p27 = pneg %p21
      %p28 = scmp.eq.s32.totalorder %s12, 1
      %p29 = por %p27, %p28
      %p30 = scmp.ne.s32.totalorder %s22, %s25
      %p31 = scmp.eq.s32.totalorder %s12, 0
      %p32 = por %p30, %p31
      %p33 = scmp.ne.s32.totalorder %s22, %s25
      %p34 = scmp.eq.s32.totalorder %s17, 1
      %p35 = por %p33, %p34
      %p36 = scmp.ne.s32.totalorder %s25, %s26
      %p37 = scmp.eq.s32.totalorder %s17, 0
      %p38 = por %p36, %p37
      %p39 = scmp.ne.s32.totalorder %s25, %s26
      %p40 = scmp.eq.s32.totalorder %s18, 1
      %p41 = por %p39, %p40
      %p43 = scmp.ne.s32.totalorder %s26, %s42
      %p44 = scmp.eq.s32.totalorder %s18, 0
      %p45 = por %p43, %p44
      %s46 = ssub.s32 %s12, %s19
      %p47 = scmp.eq.s32.totalorder %s46, 0
      %s49 = sadd.s32 %s48, 1
      %s50 = scalar_select %p47, %s48, %s49
      %p53 = pneg %p47
      %p54 = scmp.eq.s32.totalorder %s12, 1
      %p55 = por %p53, %p54
      %p56 = scmp.ne.s32.totalorder %s48, %s51
      %p57 = scmp.eq.s32.totalorder %s12, 0
      %p58 = por %p56, %p57
      %p59 = scmp.ne.s32.totalorder %s48, %s51
      %p60 = scmp.eq.s32.totalorder %s17, 1
      %p61 = por %p59, %p60
      %p62 = scmp.ne.s32.totalorder %s51, %s52
      %p63 = scmp.eq.s32.totalorder %s17, 0
      %p64 = por %p62, %p63
      %p65 = scmp.ne.s32.totalorder %s51, %s52
      %p66 = scmp.eq.s32.totalorder %s18, 1
      %p67 = por %p65, %p66
      %p69 = scmp.ne.s32.totalorder %s52, %s68
      %p70 = scmp.eq.s32.totalorder %s18, 0
      %p71 = por %p69, %p70
      %s73 = sadd.s32 %s72, 1
      %p76 = scmp.eq.s32.totalorder %s12, 1
      %p77 = scmp.ne.s32.totalorder %s72, %s74
      %p78 = scmp.eq.s32.totalorder %s12, 0
      %p79 = por %p77, %p78
      %p80 = scmp.ne.s32.totalorder %s72, %s74
      %p81 = scmp.eq.s32.totalorder %s17, 1
      %p82 = por %p80, %p81
      %p83 = scmp.ne.s32.totalorder %s74, %s75
      %p84 = scmp.eq.s32.totalorder %s17, 0
      %p85 = por %p83, %p84
      %p86 = scmp.ne.s32.totalorder %s74, %s75
      %p87 = scmp.eq.s32.totalorder %s18, 1
      %p88 = por %p86, %p87
      %p90 = scmp.ne.s32.totalorder %s75, %s89
      %p91 = scmp.eq.s32.totalorder %s18, 0
      %p92 = por %p90, %p91
      %s93 = ssub.s32 %s12, %s19
      %p94 = scmp.eq.s32.totalorder %s93, 0
      %s96 = sadd.s32 %s95, 1
      %s97 = scalar_select %p94, %s95, %s96
      %p100 = pneg %p94
      %p101 = scmp.eq.s32.totalorder %s12, 1
      %p102 = por %p100, %p101
      %p103 = scmp.ne.s32.totalorder %s95, %s98
      %p104 = scmp.eq.s32.totalorder %s12, 0
      %p105 = por %p103, %p104
      %p106 = scmp.ne.s32.totalorder %s95, %s98
      %p107 = scmp.eq.s32.totalorder %s17, 1
      %p108 = por %p106, %p107
      %p109 = scmp.ne.s32.totalorder %s98, %s99
      %p110 = scmp.eq.s32.totalorder %s17, 0
      %p111 = por %p109, %p110
      %p112 = scmp.ne.s32.totalorder %s98, %s99
      %p113 = scmp.eq.s32.totalorder %s18, 1
      %p114 = por %p112, %p113
      %p116 = scmp.ne.s32.totalorder %s99, %s115
      %p117 = scmp.eq.s32.totalorder %s18, 0
      %p118 = por %p116, %p117
      %p119 = scmp.le.s32.totalorder 1, %s12
      %p120 = scmp.lt.s32.totalorder %s12, 3
      %p121 = pnand %p119, %p120
      %p122 = pneg %p121
      // Predicated region
      $region9: #{transformer_block.1} parent=5 // pred_check
        _
      $region10: #{transformer_block.1} parent=5 // pred_check_branch
        %124 = sbr.rel (%p121) target = $region12
      $region11: #{transformer_block.1} parent=5 // pred_region
        %s125 = ssub.s32 %s12, 1
        // Predicated region
        $region13: #{transformer_block.1} parent=11 // pred_check
          %p126 = pneg %p85
        $region14: #{transformer_block.1} parent=11 // pred_check_branch
          %128 = sbr.rel (%p126) target = $region16
        $region15: #{transformer_block.1} parent=11 // pred_region
          _
        $region16: #{transformer_block.1} parent=11 // pred_fallthru
          _
      $region12: #{transformer_block.1} parent=5 // pred_fallthru
        _
      %p129 = scmp.lt.s32.totalorder %s12, 2
      // Predicated region
      $region17: #{transformer_block.1} parent=5 // pred_check
        %p130 = pneg %p129
      $region18: #{transformer_block.1} parent=5 // pred_check_branch
        %132 = sbr.rel (%p130) target = $region20
      $region19: #{transformer_block.1} parent=5 // pred_region
        // Predicated region
        $region21: #{transformer_block.1} parent=19 // pred_check
          %p133 = pneg %p32
        $region22: #{transformer_block.1} parent=19 // pred_check_branch
          %135 = sbr.rel (%p133) target = $region24
        $region23: #{transformer_block.1} parent=19 // pred_region
          %p136 = scmp.lt.s32.totalorder %s12, 1
          %s137 = scalar_select %p136, %s12, 1
          %s138 = smul.addr %s137, 8
          %s139 = scalar_lea.vmem %s0, %s138
        $region24: #{transformer_block.1} parent=19 // pred_fallthru
          _
        // Predicated region
        $region25: #{transformer_block.1} parent=19 // pred_check
          %p140 = pneg %p58
        $region26: #{transformer_block.1} parent=19 // pred_check_branch
          %142 = sbr.rel (%p140) target = $region28
        $region27: #{transformer_block.1} parent=19 // pred_region
          %p143 = scmp.lt.s32.totalorder %s12, 1
          %s144 = scalar_select %p143, %s12, 1
          %s145 = smul.addr %s144, 8
          %s146 = scalar_lea.vmem %s1, %s145
        $region28: #{transformer_block.1} parent=19 // pred_fallthru
          _
      $region20: #{transformer_block.1} parent=5 // pred_fallthru
        _
      %p147 = scmp.le.s32.totalorder 1, %s12
      %p148 = scmp.lt.s32.totalorder %s12, 3
      %p149 = pnand %p147, %p148
      %p150 = pneg %p149
      // Predicated region
      $region29: #{transformer_block.1} parent=5 // pred_check
        _
      $region30: #{transformer_block.1} parent=5 // pred_check_branch
        %152 = sbr.rel (%p149) target = $region32
      $region31: #{transformer_block.1} parent=5 // pred_region
        %s153 = ssub.s32 %s12, 1
        %p154 = scmp.lt.s32.totalorder %s17, 1
        %s155 = scalar_select %p154, %s17, 1
        %s156 = smul.addr %s155, 8
        %s157 = scalar_lea.vmem %s0, %s156
        %p158 = pneg %p38
        %p159 = pneg %p35
        %p160 = scmp.lt.s32.totalorder %s17, 1
        %s161 = scalar_select %p160, %s17, 1
        %s162 = smul.addr %s161, 8
        %s163 = scalar_lea.vmem %s1, %s162
        %p164 = pneg %p64
        %p165 = pneg %p61
        %p166 = pneg %p85
        %p167 = pneg %p82
        %p168 = pneg %p111
        %p169 = pneg %p108
        %s170 = sand.u32 %s98, 1
        %s171 = scalar_lea.sflag [#allocation3], %s170
        %s172 = sand.u32 %s98, 1
        %s173 = smul.addr %s172, 8
        %s174 = scalar_lea.vmem [#allocation2], %s173
        %p175 = scmp.lt.s32.totalorder %s17, 1
        %s176 = scalar_select %p175, %s17, 1
        %s177 = smul.addr %s176, 8
        %s178 = scalar_lea.vmem %s0, %s177
        %p179 = scmp.lt.s32.totalorder %s17, 1
        %s180 = scalar_select %p179, %s17, 1
        %s181 = smul.addr %s180, 8
        %s182 = scalar_lea.vmem %s1, %s181
        %v183 = vld [vmem:[%s178] sm:$0xff]
        %v184 = vld [vmem:[%s182] sm:$0xff]
        %v185 = vld [vmem:[%s2] sm:$0xff]
        %v186 = vld [vmem:[%s2 + $0x8] sm:$0xff]
        %v187 = vld [vmem:[%s2 + $0x10] sm:$0xff]
        %v188 = vld [vmem:[%s2 + $0x18] sm:$0xff]
        %v189 = vld [vmem:[%s2 + $0x20] sm:$0xff]
        %v190 = vld [vmem:[%s2 + $0x28] sm:$0xff]
        %v191 = vld [vmem:[%s2 + $0x30] sm:$0xff]
        %v192 = vld [vmem:[%s2 + $0x38] sm:$0xff]
        %v193 = vld [vmem:[%s2 + $0x40] sm:$0xff]
        %v194 = vld [vmem:[%s2 + $0x48] sm:$0xff]
        %v195 = vld [vmem:[%s2 + $0x50] sm:$0xff]
        %v196 = vld [vmem:[%s2 + $0x58] sm:$0xff]
        %v197 = vld [vmem:[%s2 + $0x60] sm:$0xff]
        %v198 = vld [vmem:[%s2 + $0x68] sm:$0xff]
        %v199 = vld [vmem:[%s2 + $0x70] sm:$0xff]
        %v200 = vld [vmem:[%s2 + $0x78] sm:$0xff]
        %v201 = vld [vmem:[%s2 + $0x80] sm:$0xff]
        %v202 = vld [vmem:[%s2 + $0x88] sm:$0xff]
        %v203 = vld [vmem:[%s2 + $0x90] sm:$0xff]
        %v204 = vld [vmem:[%s2 + $0x98] sm:$0xff]
        %v205 = vld [vmem:[%s2 + $0xa0] sm:$0xff]
        %v206 = vld [vmem:[%s2 + $0xa8] sm:$0xff]
        %v207 = vld [vmem:[%s2 + $0xb0] sm:$0xff]
        %v208 = vld [vmem:[%s2 + $0xb8] sm:$0xff]
        %v209 = vld [vmem:[%s2 + $0xc0] sm:$0xff]
        %v210 = vld [vmem:[%s2 + $0xc8] sm:$0xff]
        %v211 = vld [vmem:[%s2 + $0xd0] sm:$0xff]
        %v212 = vld [vmem:[%s2 + $0xd8] sm:$0xff]
        %v213 = vld [vmem:[%s2 + $0xe0] sm:$0x1]
        %v214 = vld [vmem:[%s2 + $0xe1] sm:$0x1]
        %v215 = vld [vmem:[%s2 + $0xe2] sm:$0x1]
        %v216 = vld [vmem:[%s2 + $0xe3] sm:$0x1]
        %v217 = vld [vmem:[%s2 + $0xe4] sm:$0x1]
        %v218 = vld [vmem:[%s2 + $0xe5] sm:$0x1]
        %v219 = vld [vmem:[%s2 + $0xe6] sm:$0x1]
        %v220 = vld [vmem:[%s2 + $0xe7] sm:$0x1]
        %v221 = vld [vmem:[%s2 + $0xe8] sm:$0x1]
        %v222 = vld [vmem:[%s2 + $0xe9] sm:$0x1]
        %v223 = vld [vmem:[%s2 + $0xea] sm:$0x1]
        %v224 = vld [vmem:[%s2 + $0xeb] sm:$0x1]
        %v225 = vlaneseq
        %v226 = vshrl.u32 %v225, 7
        %v227 = vsub.s32 0, %v226
        %v228 = vrot.slane %v213, %v227
        %vm229 = vcmask 261120
        %v231 = vsel %vm229, %v183, 0
        %233 = vmatprep.subr.mxu0 0.0
        %234 = vmatpush1.msra.mxu0 %v185
        %235 = vmatprep.subr.mxu0 0.0
        %236 = vmatpush1.msra.mxu0 %v186
        %237 = vmatprep.subr.mxu0 0.0
        %238 = vmatpush1.msra.mxu0 %v187
        %239 = vmatprep.subr.mxu0 0.0
        %240 = vmatpush1.msra.mxu0 %v188
        %241 = vmatprep.subr.mxu0 0.0
        %242 = vmatpush1.msra.mxu0 0.0
        %243 = vmatprep.subr.mxu0 0.0
        %244 = vmatpush1.msra.mxu0 0.0
        %245 = vmatprep.subr.mxu0 0.0
        %246 = vmatpush1.msra.mxu0 0.0
        %247 = vmatprep.subr.mxu0 0.0
        %248 = vmatpush1.msra.mxu0 0.0
        %249 = vmatprep.subr.mxu0 0.0
        %250 = vmatpush1.msra.mxu0 0.0
        %251 = vmatprep.subr.mxu0 0.0
        %252 = vmatpush1.msra.mxu0 0.0
        %253 = vmatprep.subr.mxu0 0.0
        %254 = vmatpush1.msra.mxu0 0.0
        %255 = vmatprep.subr.mxu0 0.0
        %256 = vmatpush1.msra.mxu0 0.0
        %257 = vmatprep.subr.mxu0 0.0
        %258 = vmatpush1.msra.mxu0 0.0
        %259 = vmatprep.subr.mxu0 0.0
        %260 = vmatpush1.msra.mxu0 0.0
        %261 = vmatprep.subr.mxu0 0.0
        %262 = vmatpush1.msra.mxu0 0.0
        %263 = vmatprep.subr.mxu0 0.0
        %264 = vmatpush1.msra.mxu0 0.0
        %265 = vmatprep.subr.mxu0 0.0
        %266 = vmatpush1.msra.mxu0 0.0
        %267 = vmatprep.subr.mxu0 0.0
        %268 = vmatpush1.msra.mxu0 0.0
        %269 = vmatprep.subr.mxu0 0.0
        %270 = vmatpush1.msra.mxu0 0.0
        %271 = vmatprep.subr.mxu0 0.0
        %272 = vmatpush1.msra.mxu0 0.0
        %273 = vmatprep.subr.mxu0 0.0
        %274 = vmatpush1.msra.mxu0 0.0
        %275 = vmatprep.subr.mxu0 0.0
        %276 = vmatpush1.msra.mxu0 0.0
        %277 = vmatprep.subr.mxu0 0.0
        %278 = vmatpush1.msra.mxu0 0.0
        %279 = vmatprep.subr.mxu0 0.0
        %280 = vmatpush1.msra.mxu0 0.0
        %281 = vmatprep.subr.mxu0 0.0
        %282 = vmatpush1.msra.mxu0 0.0
        %283 = vmatprep.subr.mxu0 0.0
        %284 = vmatpush1.msra.mxu0 0.0
        %285 = vmatprep.subr.mxu0 0.0
        %286 = vmatpush1.msra.mxu0 0.0
        %287 = vmatprep.subr.mxu0 0.0
        %288 = vmatpush1.msra.mxu0 0.0
        %289 = vmatprep.subr.mxu0 0.0
        %290 = vmatpush1.msra.mxu0 0.0
        %291 = vmatprep.subr.mxu0 0.0
        %292 = vmatpush1.msra.mxu0 0.0
        %293 = vmatprep.subr.mxu0 0.0
        %294 = vmatpush1.msra.mxu0 0.0
        %295 = vmatprep.subr.mxu0 0.0
        %296 = vmatpush1.msra.mxu0 0.0
        %297 = vmatprep.mubr.f32.mxu0 0.0
        %298 = vmatmul.mubr.f32.gmra.mrb[0].mxu0 %v231
        %v299 = vpop.f32.mrb[0].mxu0
        %v300 = vadd.f32 %v228, %v299
        %v301 = vpop.f32.mrb[0].mxu0
        %302 = vdwg.mxu0
        %304 = vrot.lane.b32.xlu0 %v300, 96
        %v305 = vpop.permute.xlu0 %304
        %vm306 = vcmask 64512
        %v307 = vsel %vm306, %v300, 0
        %v309 = vsel %vm306, %v305, 0
        %311 = vmatprep.subr.mxu0 0.0
        %312 = vmatpush1.xpose.msra.mxu0 %v309
        %313 = vmatprep.subr.mxu0 0.0
        %314 = vmatpush1.xpose.msra.mxu0 0.0
        %315 = vmatprep.subr.mxu0 0.0
        %316 = vmatpush1.xpose.msra.mxu0 0.0
        %317 = vmatprep.subr.mxu0 0.0
        %318 = vmatpush1.xpose.msra.mxu0 0.0
        %319 = vmatprep.subr.mxu0 0.0
        %320 = vmatpush1.xpose.msra.mxu0 0.0
        %321 = vmatprep.subr.mxu0 0.0
        %322 = vmatpush1.xpose.msra.mxu0 0.0
        %323 = vmatprep.subr.mxu0 0.0
        %324 = vmatpush1.xpose.msra.mxu0 0.0
        %325 = vmatprep.subr.mxu0 0.0
        %326 = vmatpush1.xpose.msra.mxu0 0.0
        %327 = vmatprep.subr.mxu0 0.0
        %328 = vmatpush1.xpose.msra.mxu0 0.0
        %329 = vmatprep.subr.mxu0 0.0
        %330 = vmatpush1.xpose.msra.mxu0 0.0
        %331 = vmatprep.subr.mxu0 0.0
        %332 = vmatpush1.xpose.msra.mxu0 0.0
        %333 = vmatprep.subr.mxu0 0.0
        %334 = vmatpush1.xpose.msra.mxu0 0.0
        %335 = vmatprep.subr.mxu0 0.0
        %336 = vmatpush1.xpose.msra.mxu0 0.0
        %337 = vmatprep.subr.mxu0 0.0
        %338 = vmatpush1.xpose.msra.mxu0 0.0
        %339 = vmatprep.subr.mxu0 0.0
        %340 = vmatpush1.xpose.msra.mxu0 0.0
        %341 = vmatprep.subr.mxu0 0.0
        %342 = vmatpush1.xpose.msra.mxu0 0.0
        %343 = vmatprep.subr.mxu0 0.0
        %344 = vmatpush1.xpose.msra.mxu0 0.0
        %345 = vmatprep.subr.mxu0 0.0
        %346 = vmatpush1.xpose.msra.mxu0 0.0
        %347 = vmatprep.subr.mxu0 0.0
        %348 = vmatpush1.xpose.msra.mxu0 0.0
        %349 = vmatprep.subr.mxu0 0.0
        %350 = vmatpush1.xpose.msra.mxu0 0.0
        %351 = vmatprep.subr.mxu0 0.0
        %352 = vmatpush1.xpose.msra.mxu0 0.0
        %353 = vmatprep.subr.mxu0 0.0
        %354 = vmatpush1.xpose.msra.mxu0 0.0
        %355 = vmatprep.subr.mxu0 0.0
        %356 = vmatpush1.xpose.msra.mxu0 0.0
        %357 = vmatprep.subr.mxu0 0.0
        %358 = vmatpush1.xpose.msra.mxu0 0.0
        %359 = vmatprep.subr.mxu0 0.0
        %360 = vmatpush1.xpose.msra.mxu0 0.0
        %361 = vmatprep.subr.mxu0 0.0
        %362 = vmatpush1.xpose.msra.mxu0 0.0
        %363 = vmatprep.subr.mxu0 0.0
        %364 = vmatpush1.xpose.msra.mxu0 0.0
        %365 = vmatprep.subr.mxu0 0.0
        %366 = vmatpush1.xpose.msra.mxu0 0.0
        %367 = vmatprep.subr.mxu0 0.0
        %368 = vmatpush1.xpose.msra.mxu0 0.0
        %369 = vmatprep.subr.mxu0 0.0
        %370 = vmatpush1.xpose.msra.mxu0 0.0
        %371 = vmatprep.subr.mxu0 0.0
        %372 = vmatpush1.xpose.msra.mxu0 0.0
        %373 = vmatprep.subr.mxu0 0.0
        %374 = vmatpush1.xpose.msra.mxu0 0.0
        %375 = vmatprep.mubr.f32.mxu0 0.0
        %376 = vmatmul.mubr.f32.gmra.mrb[0].mxu0 %v307
        %v377 = vpop.f32.mrb[0].mxu0
        %v378 = vadd.f32 0.0, %v377
        %v379 = vpop.f32.mrb[0].mxu0
        %380 = vdwg.mxu0
        %381 = vrot.lane.b32.xlu0 %v300, 120
        %v382 = vpop.permute.xlu0 %381
        %383 = vrot.lane.b32.xlu0 %v300, 88
        %v384 = vpop.permute.xlu0 %383
        %v385 = vsel %vm306, %v382, 0
        %v387 = vsel %vm306, %v384, 0
        %389 = vmatprep.subr.mxu0 0.0
        %390 = vmatpush1.xpose.msra.mxu0 %v387
        %391 = vmatprep.subr.mxu0 0.0
        %392 = vmatpush1.xpose.msra.mxu0 0.0
        %393 = vmatprep.subr.mxu0 0.0
        %394 = vmatpush1.xpose.msra.mxu0 0.0
        %395 = vmatprep.subr.mxu0 0.0
        %396 = vmatpush1.xpose.msra.mxu0 0.0
        %397 = vmatprep.subr.mxu0 0.0
        %398 = vmatpush1.xpose.msra.mxu0 0.0
        %399 = vmatprep.subr.mxu0 0.0
        %400 = vmatpush1.xpose.msra.mxu0 0.0
        %401 = vmatprep.subr.mxu0 0.0
        %402 = vmatpush1.xpose.msra.mxu0 0.0
        %403 = vmatprep.subr.mxu0 0.0
        %404 = vmatpush1.xpose.msra.mxu0 0.0
        %405 = vmatprep.subr.mxu0 0.0
        %406 = vmatpush1.xpose.msra.mxu0 0.0
        %407 = vmatprep.subr.mxu0 0.0
        %408 = vmatpush1.xpose.msra.mxu0 0.0
        %409 = vmatprep.subr.mxu0 0.0
        %410 = vmatpush1.xpose.msra.mxu0 0.0
        %411 = vmatprep.subr.mxu0 0.0
        %412 = vmatpush1.xpose.msra.mxu0 0.0
        %413 = vmatprep.subr.mxu0 0.0
        %414 = vmatpush1.xpose.msra.mxu0 0.0
        %415 = vmatprep.subr.mxu0 0.0
        %416 = vmatpush1.xpose.msra.mxu0 0.0
        %417 = vmatprep.subr.mxu0 0.0
        %418 = vmatpush1.xpose.msra.mxu0 0.0
        %419 = vmatprep.subr.mxu0 0.0
        %420 = vmatpush1.xpose.msra.mxu0 0.0
        %421 = vmatprep.subr.mxu0 0.0
        %422 = vmatpush1.xpose.msra.mxu0 0.0
        %423 = vmatprep.subr.mxu0 0.0
        %424 = vmatpush1.xpose.msra.mxu0 0.0
        %425 = vmatprep.subr.mxu0 0.0
        %426 = vmatpush1.xpose.msra.mxu0 0.0
        %427 = vmatprep.subr.mxu0 0.0
        %428 = vmatpush1.xpose.msra.mxu0 0.0
        %429 = vmatprep.subr.mxu0 0.0
        %430 = vmatpush1.xpose.msra.mxu0 0.0
        %431 = vmatprep.subr.mxu0 0.0
        %432 = vmatpush1.xpose.msra.mxu0 0.0
        %433 = vmatprep.subr.mxu0 0.0
        %434 = vmatpush1.xpose.msra.mxu0 0.0
        %435 = vmatprep.subr.mxu0 0.0
        %436 = vmatpush1.xpose.msra.mxu0 0.0
        %437 = vmatprep.subr.mxu0 0.0
        %438 = vmatpush1.xpose.msra.mxu0 0.0
        %439 = vmatprep.subr.mxu0 0.0
        %440 = vmatpush1.xpose.msra.mxu0 0.0
        %441 = vmatprep.subr.mxu0 0.0
        %442 = vmatpush1.xpose.msra.mxu0 0.0
        %443 = vmatprep.subr.mxu0 0.0
        %444 = vmatpush1.xpose.msra.mxu0 0.0
        %445 = vmatprep.subr.mxu0 0.0
        %446 = vmatpush1.xpose.msra.mxu0 0.0
        %447 = vmatprep.subr.mxu0 0.0
        %448 = vmatpush1.xpose.msra.mxu0 0.0
        %449 = vmatprep.subr.mxu0 0.0
        %450 = vmatpush1.xpose.msra.mxu0 0.0
        %451 = vmatprep.subr.mxu0 0.0
        %452 = vmatpush1.xpose.msra.mxu0 0.0
        %453 = vmatprep.mubr.f32.mxu0 0.0
        %454 = vmatmul.mubr.f32.gmra.mrb[0].mxu0 %v385
        %v455 = vpop.f32.mrb[0].mxu0
        %v456 = vadd.f32 0.0, %v455
        %v457 = vpop.f32.mrb[0].mxu0
        %458 = vdwg.mxu0
        %459 = vrot.lane.b32.xlu0 %v300, 112
        %v460 = vpop.permute.xlu0 %459
        %461 = vrot.lane.b32.xlu0 %v300, 80
        %v462 = vpop.permute.xlu0 %461
        %v463 = vsel %vm306, %v460, 0
        %v465 = vsel %vm306, %v462, 0
        %467 = vmatprep.subr.mxu0 0.0
        %468 = vmatpush1.xpose.msra.mxu0 %v465
        %469 = vmatprep.subr.mxu0 0.0
        %470 = vmatpush1.xpose.msra.mxu0 0.0
        %471 = vmatprep.subr.mxu0 0.0
        %472 = vmatpush1.xpose.msra.mxu0 0.0
        %473 = vmatprep.subr.mxu0 0.0
        %474 = vmatpush1.xpose.msra.mxu0 0.0
        %475 = vmatprep.subr.mxu0 0.0
        %476 = vmatpush1.xpose.msra.mxu0 0.0
        %477 = vmatprep.subr.mxu0 0.0
        %478 = vmatpush1.xpose.msra.mxu0 0.0
        %479 = vmatprep.subr.mxu0 0.0
        %480 = vmatpush1.xpose.msra.mxu0 0.0
        %481 = vmatprep.subr.mxu0 0.0
        %482 = vmatpush1.xpose.msra.mxu0 0.0
        %483 = vmatprep.subr.mxu0 0.0
        %484 = vmatpush1.xpose.msra.mxu0 0.0
        %485 = vmatprep.subr.mxu0 0.0
        %486 = vmatpush1.xpose.msra.mxu0 0.0
        %487 = vmatprep.subr.mxu0 0.0
        %488 = vmatpush1.xpose.msra.mxu0 0.0
        %489 = vmatprep.subr.mxu0 0.0
        %490 = vmatpush1.xpose.msra.mxu0 0.0
        %491 = vmatprep.subr.mxu0 0.0
        %492 = vmatpush1.xpose.msra.mxu0 0.0
        %493 = vmatprep.subr.mxu0 0.0
        %494 = vmatpush1.xpose.msra.mxu0 0.0
        %495 = vmatprep.subr.mxu0 0.0
        %496 = vmatpush1.xpose.msra.mxu0 0.0
        %497 = vmatprep.subr.mxu0 0.0
        %498 = vmatpush1.xpose.msra.mxu0 0.0
        %499 = vmatprep.subr.mxu0 0.0
        %500 = vmatpush1.xpose.msra.mxu0 0.0
        %501 = vmatprep.subr.mxu0 0.0
        %502 = vmatpush1.xpose.msra.mxu0 0.0
        %503 = vmatprep.subr.mxu0 0.0
        %504 = vmatpush1.xpose.msra.mxu0 0.0
        %505 = vmatprep.subr.mxu0 0.0
        %506 = vmatpush1.xpose.msra.mxu0 0.0
        %507 = vmatprep.subr.mxu0 0.0
        %508 = vmatpush1.xpose.msra.mxu0 0.0
        %509 = vmatprep.subr.mxu0 0.0
        %510 = vmatpush1.xpose.msra.mxu0 0.0
        %511 = vmatprep.subr.mxu0 0.0
        %512 = vmatpush1.xpose.msra.mxu0 0.0
        %513 = vmatprep.subr.mxu0 0.0
        %514 = vmatpush1.xpose.msra.mxu0 0.0
        %515 = vmatprep.subr.mxu0 0.0
        %516 = vmatpush1.xpose.msra.mxu0 0.0
        %517 = vmatprep.subr.mxu0 0.0
        %518 = vmatpush1.xpose.msra.mxu0 0.0
        %519 = vmatprep.subr.mxu0 0.0
        %520 = vmatpush1.xpose.msra.mxu0 0.0
        %521 = vmatprep.subr.mxu0 0.0
        %522 = vmatpush1.xpose.msra.mxu0 0.0
        %523 = vmatprep.subr.mxu0 0.0
        %524 = vmatpush1.xpose.msra.mxu0 0.0
        %525 = vmatprep.subr.mxu0 0.0
        %526 = vmatpush1.xpose.msra.mxu0 0.0
        %527 = vmatprep.subr.mxu0 0.0
        %528 = vmatpush1.xpose.msra.mxu0 0.0
        %529 = vmatprep.subr.mxu0 0.0
        %530 = vmatpush1.xpose.msra.mxu0 0.0
        %531 = vmatprep.mubr.f32.mxu0 0.0
        %532 = vmatmul.mubr.f32.gmra.mrb[0].mxu0 %v463
        %v533 = vpop.f32.mrb[0].mxu0
        %v534 = vadd.f32 0.0, %v533
        %v535 = vpop.f32.mrb[0].mxu0
        %536 = vdwg.mxu0
        %537 = vrot.lane.b32.xlu0 %v300, 104
        %v538 = vpop.permute.xlu0 %537
        %539 = vrot.lane.b32.xlu0 %v300, 72
        %v540 = vpop.permute.xlu0 %539
        %v541 = vsel %vm306, %v538, 0
        %v543 = vsel %vm306, %v540, 0
        %545 = vmatprep.subr.mxu0 0.0
        %546 = vmatpush1.xpose.msra.mxu0 %v543
        %547 = vmatprep.subr.mxu0 0.0
        %548 = vmatpush1.xpose.msra.mxu0 0.0
        %549 = vmatprep.subr.mxu0 0.0
        %550 = vmatpush1.xpose.msra.mxu0 0.0
        %551 = vmatprep.subr.mxu0 0.0
        %552 = vmatpush1.xpose.msra.mxu0 0.0
        %553 = vmatprep.subr.mxu0 0.0
        %554 = vmatpush1.xpose.msra.mxu0 0.0
        %555 = vmatprep.subr.mxu0 0.0
        %556 = vmatpush1.xpose.msra.mxu0 0.0
        %557 = vmatprep.subr.mxu0 0.0
        %558 = vmatpush1.xpose.msra.mxu0 0.0
        %559 = vmatprep.subr.mxu0 0.0
        %560 = vmatpush1.xpose.msra.mxu0 0.0
        %561 = vmatprep.subr.mxu0 0.0
        %562 = vmatpush1.xpose.msra.mxu0 0.0
        %563 = vmatprep.subr.mxu0 0.0
        %564 = vmatpush1.xpose.msra.mxu0 0.0
        %565 = vmatprep.subr.mxu0 0.0
        %566 = vmatpush1.xpose.msra.mxu0 0.0
        %567 = vmatprep.subr.mxu0 0.0
        %568 = vmatpush1.xpose.msra.mxu0 0.0
        %569 = vmatprep.subr.mxu0 0.0
        %570 = vmatpush1.xpose.msra.mxu0 0.0
        %571 = vmatprep.subr.mxu0 0.0
        %572 = vmatpush1.xpose.msra.mxu0 0.0
        %573 = vmatprep.subr.mxu0 0.0
        %574 = vmatpush1.xpose.msra.mxu0 0.0
        %575 = vmatprep.subr.mxu0 0.0
        %576 = vmatpush1.xpose.msra.mxu0 0.0
        %577 = vmatprep.subr.mxu0 0.0
        %578 = vmatpush1.xpose.msra.mxu0 0.0
        %579 = vmatprep.subr.mxu0 0.0
        %580 = vmatpush1.xpose.msra.mxu0 0.0
        %581 = vmatprep.subr.mxu0 0.0
        %582 = vmatpush1.xpose.msra.mxu0 0.0
        %583 = vmatprep.subr.mxu0 0.0
        %584 = vmatpush1.xpose.msra.mxu0 0.0
        %585 = vmatprep.subr.mxu0 0.0
        %586 = vmatpush1.xpose.msra.mxu0 0.0
        %587 = vmatprep.subr.mxu0 0.0
        %588 = vmatpush1.xpose.msra.mxu0 0.0
        %589 = vmatprep.subr.mxu0 0.0
        %590 = vmatpush1.xpose.msra.mxu0 0.0
        %591 = vmatprep.subr.mxu0 0.0
        %592 = vmatpush1.xpose.msra.mxu0 0.0
        %593 = vmatprep.subr.mxu0 0.0
        %594 = vmatpush1.xpose.msra.mxu0 0.0
        %595 = vmatprep.subr.mxu0 0.0
        %596 = vmatpush1.xpose.msra.mxu0 0.0
        %597 = vmatprep.subr.mxu0 0.0
        %598 = vmatpush1.xpose.msra.mxu0 0.0
        %599 = vmatprep.subr.mxu0 0.0
        %600 = vmatpush1.xpose.msra.mxu0 0.0
        %601 = vmatprep.subr.mxu0 0.0
        %602 = vmatpush1.xpose.msra.mxu0 0.0
        %603 = vmatprep.subr.mxu0 0.0
        %604 = vmatpush1.xpose.msra.mxu0 0.0
        %605 = vmatprep.subr.mxu0 0.0
        %606 = vmatpush1.xpose.msra.mxu0 0.0
        %607 = vmatprep.subr.mxu0 0.0
        %608 = vmatpush1.xpose.msra.mxu0 0.0
        %609 = vmatprep.mubr.f32.mxu0 0.0
        %610 = vmatmul.mubr.f32.gmra.mrb[0].mxu0 %v541
        %v611 = vpop.f32.mrb[0].mxu0
        %v612 = vadd.f32 0.0, %v611
        %v613 = vpop.f32.mrb[0].mxu0
        %614 = vdwg.mxu0
        %v615 = vsel %vm306, %v378, -inf
        %616 = vmax.xlane.f32.xlu0 %v615
        %v617 = vpop.xlane.xlu0 %616
        %v618 = vsel %vm306, %v456, -inf
        %619 = vmax.xlane.f32.xlu0 %v618
        %v620 = vpop.xlane.xlu0 %619
        %v621 = vsel %vm306, %v534, -inf
        %622 = vmax.xlane.f32.xlu0 %v621
        %v623 = vpop.xlane.xlu0 %622
        %v624 = vsel %vm306, %v612, -inf
        %625 = vmax.xlane.f32.xlu0 %v624
        %v626 = vpop.xlane.xlu0 %625
        %v627 = vsub.f32 %v378, %v617
        %v628 = vsub.f32 %v456, %v620
        %v629 = vsub.f32 %v534, %v623
        %v630 = vsub.f32 %v612, %v626
        %v631 = vmul.f32 %v627, 1.442695
        %v632 = vpow.pop %v631
        %v633 = vmul.f32 %v628, 1.442695
        %v634 = vpow.pop %v633
        %v635 = vmul.f32 %v629, 1.442695
        %v636 = vpow.pop %v635
        %v637 = vmul.f32 %v630, 1.442695
        %v638 = vpow.pop %v637
        %v639 = vsel %vm306, %v632, 0.0
        %640 = vadd.xlane.f32.xlu0 %v639
        %v641 = vpop.xlane.xlu0 %640
        %v642 = vsel %vm306, %v634, 0.0
        %643 = vadd.xlane.f32.xlu0 %v642
        %v644 = vpop.xlane.xlu0 %643
        %v645 = vsel %vm306, %v636, 0.0
        %646 = vadd.xlane.f32.xlu0 %v645
        %v647 = vpop.xlane.xlu0 %646
        %v648 = vsel %vm306, %v638, 0.0
        %649 = vadd.xlane.f32.xlu0 %v648
        %v650 = vpop.xlane.xlu0 %649
        %v651 = vrcp.pop %v641
        %v652 = vrcp.pop %v644
        %v653 = vrcp.pop %v647
        %v654 = vrcp.pop %v650
        %v655 = vmul.f32 %v632, %v651
        %v656 = vmul.f32 %v634, %v652
        %v657 = vmul.f32 %v636, %v653
        %v658 = vmul.f32 %v638, %v654
        %659 = vrot.lane.b32.xlu0 %v300, 64
        %v660 = vpop.permute.xlu0 %659
        %v663 = vsel %vm306, %v655, 0
        %665 = vmatprep.subr.mxu0 0.0
        %666 = vmatpush1.msra.mxu0 %v660
        %667 = vmatprep.subr.mxu0 0.0
        %668 = vmatpush1.msra.mxu0 0.0
        %669 = vmatprep.subr.mxu0 0.0
        %670 = vmatpush1.msra.mxu0 0.0
        %671 = vmatprep.subr.mxu0 0.0
        %672 = vmatpush1.msra.mxu0 0.0
        %673 = vmatprep.subr.mxu0 0.0
        %674 = vmatpush1.msra.mxu0 0.0
        %675 = vmatprep.subr.mxu0 0.0
        %676 = vmatpush1.msra.mxu0 0.0
        %677 = vmatprep.subr.mxu0 0.0
        %678 = vmatpush1.msra.mxu0 0.0
        %679 = vmatprep.subr.mxu0 0.0
        %680 = vmatpush1.msra.mxu0 0.0
        %681 = vmatprep.subr.mxu0 0.0
        %682 = vmatpush1.msra.mxu0 0.0
        %683 = vmatprep.subr.mxu0 0.0
        %684 = vmatpush1.msra.mxu0 0.0
        %685 = vmatprep.subr.mxu0 0.0
        %686 = vmatpush1.msra.mxu0 0.0
        %687 = vmatprep.subr.mxu0 0.0
        %688 = vmatpush1.msra.mxu0 0.0
        %689 = vmatprep.subr.mxu0 0.0
        %690 = vmatpush1.msra.mxu0 0.0
        %691 = vmatprep.subr.mxu0 0.0
        %692 = vmatpush1.msra.mxu0 0.0
        %693 = vmatprep.subr.mxu0 0.0
        %694 = vmatpush1.msra.mxu0 0.0
        %695 = vmatprep.subr.mxu0 0.0
        %696 = vmatpush1.msra.mxu0 0.0
        %697 = vmatprep.subr.mxu0 0.0
        %698 = vmatpush1.msra.mxu0 0.0
        %699 = vmatprep.subr.mxu0 0.0
        %700 = vmatpush1.msra.mxu0 0.0
        %701 = vmatprep.subr.mxu0 0.0
        %702 = vmatpush1.msra.mxu0 0.0
        %703 = vmatprep.subr.mxu0 0.0
        %704 = vmatpush1.msra.mxu0 0.0
        %705 = vmatprep.subr.mxu0 0.0
        %706 = vmatpush1.msra.mxu0 0.0
        %707 = vmatprep.subr.mxu0 0.0
        %708 = vmatpush1.msra.mxu0 0.0
        %709 = vmatprep.subr.mxu0 0.0
        %710 = vmatpush1.msra.mxu0 0.0
        %711 = vmatprep.subr.mxu0 0.0
        %712 = vmatpush1.msra.mxu0 0.0
        %713 = vmatprep.subr.mxu0 0.0
        %714 = vmatpush1.msra.mxu0 0.0
        %715 = vmatprep.subr.mxu0 0.0
        %716 = vmatpush1.msra.mxu0 0.0
        %717 = vmatprep.subr.mxu0 0.0
        %718 = vmatpush1.msra.mxu0 0.0
        %719 = vmatprep.subr.mxu0 0.0
        %720 = vmatpush1.msra.mxu0 0.0
        %721 = vmatprep.subr.mxu0 0.0
        %722 = vmatpush1.msra.mxu0 0.0
        %723 = vmatprep.subr.mxu0 0.0
        %724 = vmatpush1.msra.mxu0 0.0
        %725 = vmatprep.subr.mxu0 0.0
        %726 = vmatpush1.msra.mxu0 0.0
        %727 = vmatprep.subr.mxu0 0.0
        %728 = vmatpush1.msra.mxu0 0.0
        %729 = vmatprep.mubr.f32.mxu0 0.0
        %730 = vmatmul.mubr.f32.gmra.mrb[0].mxu0 %v663
        %v731 = vpop.f32.mrb[0].mxu0
        %v732 = vadd.f32 0.0, %v731
        %v733 = vpop.f32.mrb[0].mxu0
        %734 = vdwg.mxu0
        %735 = vrot.lane.b32.xlu0 %v300, 56
        %v736 = vpop.permute.xlu0 %735
        %v739 = vsel %vm306, %v656, 0
        %741 = vmatprep.subr.mxu0 0.0
        %742 = vmatpush1.msra.mxu0 %v736
        %743 = vmatprep.subr.mxu0 0.0
        %744 = vmatpush1.msra.mxu0 0.0
        %745 = vmatprep.subr.mxu0 0.0
        %746 = vmatpush1.msra.mxu0 0.0
        %747 = vmatprep.subr.mxu0 0.0
        %748 = vmatpush1.msra.mxu0 0.0
        %749 = vmatprep.subr.mxu0 0.0
        %750 = vmatpush1.msra.mxu0 0.0
        %751 = vmatprep.subr.mxu0 0.0
        %752 = vmatpush1.msra.mxu0 0.0
        %753 = vmatprep.subr.mxu0 0.0
        %754 = vmatpush1.msra.mxu0 0.0
        %755 = vmatprep.subr.mxu0 0.0
        %756 = vmatpush1.msra.mxu0 0.0
        %757 = vmatprep.subr.mxu0 0.0
        %758 = vmatpush1.msra.mxu0 0.0
        %759 = vmatprep.subr.mxu0 0.0
        %760 = vmatpush1.msra.mxu0 0.0
        %761 = vmatprep.subr.mxu0 0.0
        %762 = vmatpush1.msra.mxu0 0.0
        %763 = vmatprep.subr.mxu0 0.0
        %764 = vmatpush1.msra.mxu0 0.0
        %765 = vmatprep.subr.mxu0 0.0
        %766 = vmatpush1.msra.mxu0 0.0
        %767 = vmatprep.subr.mxu0 0.0
        %768 = vmatpush1.msra.mxu0 0.0
        %769 = vmatprep.subr.mxu0 0.0
        %770 = vmatpush1.msra.mxu0 0.0
        %771 = vmatprep.subr.mxu0 0.0
        %772 = vmatpush1.msra.mxu0 0.0
        %773 = vmatprep.subr.mxu0 0.0
        %774 = vmatpush1.msra.mxu0 0.0
        %775 = vmatprep.subr.mxu0 0.0
        %776 = vmatpush1.msra.mxu0 0.0
        %777 = vmatprep.subr.mxu0 0.0
        %778 = vmatpush1.msra.mxu0 0.0
        %779 = vmatprep.subr.mxu0 0.0
        %780 = vmatpush1.msra.mxu0 0.0
        %781 = vmatprep.subr.mxu0 0.0
        %782 = vmatpush1.msra.mxu0 0.0
        %783 = vmatprep.subr.mxu0 0.0
        %784 = vmatpush1.msra.mxu0 0.0
        %785 = vmatprep.subr.mxu0 0.0
        %786 = vmatpush1.msra.mxu0 0.0
        %787 = vmatprep.subr.mxu0 0.0
        %788 = vmatpush1.msra.mxu0 0.0
        %789 = vmatprep.subr.mxu0 0.0
        %790 = vmatpush1.msra.mxu0 0.0
        %791 = vmatprep.subr.mxu0 0.0
        %792 = vmatpush1.msra.mxu0 0.0
        %793 = vmatprep.subr.mxu0 0.0
        %794 = vmatpush1.msra.mxu0 0.0
        %795 = vmatprep.subr.mxu0 0.0
        %796 = vmatpush1.msra.mxu0 0.0
        %797 = vmatprep.subr.mxu0 0.0
        %798 = vmatpush1.msra.mxu0 0.0
        %799 = vmatprep.subr.mxu0 0.0
        %800 = vmatpush1.msra.mxu0 0.0
        %801 = vmatprep.subr.mxu0 0.0
        %802 = vmatpush1.msra.mxu0 0.0
        %803 = vmatprep.subr.mxu0 0.0
        %804 = vmatpush1.msra.mxu0 0.0
        %805 = vmatprep.mubr.f32.mxu0 0.0
        %806 = vmatmul.mubr.f32.gmra.mrb[0].mxu0 %v739
        %v807 = vpop.f32.mrb[0].mxu0
        %v808 = vadd.f32 0.0, %v807
        %v809 = vpop.f32.mrb[0].mxu0
        %810 = vdwg.mxu0
        %811 = vrot.lane.b32.xlu0 %v300, 48
        %v812 = vpop.permute.xlu0 %811
        %v815 = vsel %vm306, %v657, 0
        %817 = vmatprep.subr.mxu0 0.0
        %818 = vmatpush1.msra.mxu0 %v812
        %819 = vmatprep.subr.mxu0 0.0
        %820 = vmatpush1.msra.mxu0 0.0
        %821 = vmatprep.subr.mxu0 0.0
        %822 = vmatpush1.msra.mxu0 0.0
        %823 = vmatprep.subr.mxu0 0.0
        %824 = vmatpush1.msra.mxu0 0.0
        %825 = vmatprep.subr.mxu0 0.0
        %826 = vmatpush1.msra.mxu0 0.0
        %827 = vmatprep.subr.mxu0 0.0
        %828 = vmatpush1.msra.mxu0 0.0
        %829 = vmatprep.subr.mxu0 0.0
        %830 = vmatpush1.msra.mxu0 0.0
        %831 = vmatprep.subr.mxu0 0.0
        %832 = vmatpush1.msra.mxu0 0.0
        %833 = vmatprep.subr.mxu0 0.0
        %834 = vmatpush1.msra.mxu0 0.0
        %835 = vmatprep.subr.mxu0 0.0
        %836 = vmatpush1.msra.mxu0 0.0
        %837 = vmatprep.subr.mxu0 0.0
        %838 = vmatpush1.msra.mxu0 0.0
        %839 = vmatprep.subr.mxu0 0.0
        %840 = vmatpush1.msra.mxu0 0.0
        %841 = vmatprep.subr.mxu0 0.0
        %842 = vmatpush1.msra.mxu0 0.0
        %843 = vmatprep.subr.mxu0 0.0
        %844 = vmatpush1.msra.mxu0 0.0
        %845 = vmatprep.subr.mxu0 0.0
        %846 = vmatpush1.msra.mxu0 0.0
        %847 = vmatprep.subr.mxu0 0.0
        %848 = vmatpush1.msra.mxu0 0.0
        %849 = vmatprep.subr.mxu0 0.0
        %850 = vmatpush1.msra.mxu0 0.0
        %851 = vmatprep.subr.mxu0 0.0
        %852 = vmatpush1.msra.mxu0 0.0
        %853 = vmatprep.subr.mxu0 0.0
        %854 = vmatpush1.msra.mxu0 0.0
        %855 = vmatprep.subr.mxu0 0.0
        %856 = vmatpush1.msra.mxu0 0.0
        %857 = vmatprep.subr.mxu0 0.0
        %858 = vmatpush1.msra.mxu0 0.0
        %859 = vmatprep.subr.mxu0 0.0
        %860 = vmatpush1.msra.mxu0 0.0
        %861 = vmatprep.subr.mxu0 0.0
        %862 = vmatpush1.msra.mxu0 0.0
        %863 = vmatprep.subr.mxu0 0.0
        %864 = vmatpush1.msra.mxu0 0.0
        %865 = vmatprep.subr.mxu0 0.0
        %866 = vmatpush1.msra.mxu0 0.0
        %867 = vmatprep.subr.mxu0 0.0
        %868 = vmatpush1.msra.mxu0 0.0
        %869 = vmatprep.subr.mxu0 0.0
        %870 = vmatpush1.msra.mxu0 0.0
        %871 = vmatprep.subr.mxu0 0.0
        %872 = vmatpush1.msra.mxu0 0.0
        %873 = vmatprep.subr.mxu0 0.0
        %874 = vmatpush1.msra.mxu0 0.0
        %875 = vmatprep.subr.mxu0 0.0
        %876 = vmatpush1.msra.mxu0 0.0
        %877 = vmatprep.subr.mxu0 0.0
        %878 = vmatpush1.msra.mxu0 0.0
        %879 = vmatprep.subr.mxu0 0.0
        %880 = vmatpush1.msra.mxu0 0.0
        %881 = vmatprep.mubr.f32.mxu0 0.0
        %882 = vmatmul.mubr.f32.gmra.mrb[0].mxu0 %v815
        %v883 = vpop.f32.mrb[0].mxu0
        %v884 = vadd.f32 0.0, %v883
        %v885 = vpop.f32.mrb[0].mxu0
        %886 = vdwg.mxu0
        %887 = vrot.lane.b32.xlu0 %v300, 40
        %v888 = vpop.permute.xlu0 %887
        %v891 = vsel %vm306, %v658, 0
        %893 = vmatprep.subr.mxu0 0.0
        %894 = vmatpush1.msra.mxu0 %v888
        %895 = vmatprep.subr.mxu0 0.0
        %896 = vmatpush1.msra.mxu0 0.0
        %897 = vmatprep.subr.mxu0 0.0
        %898 = vmatpush1.msra.mxu0 0.0
        %899 = vmatprep.subr.mxu0 0.0
        %900 = vmatpush1.msra.mxu0 0.0
        %901 = vmatprep.subr.mxu0 0.0
        %902 = vmatpush1.msra.mxu0 0.0
        %903 = vmatprep.subr.mxu0 0.0
        %904 = vmatpush1.msra.mxu0 0.0
        %905 = vmatprep.subr.mxu0 0.0
        %906 = vmatpush1.msra.mxu0 0.0
        %907 = vmatprep.subr.mxu0 0.0
        %908 = vmatpush1.msra.mxu0 0.0
        %909 = vmatprep.subr.mxu0 0.0
        %910 = vmatpush1.msra.mxu0 0.0
        %911 = vmatprep.subr.mxu0 0.0
        %912 = vmatpush1.msra.mxu0 0.0
        %913 = vmatprep.subr.mxu0 0.0
        %914 = vmatpush1.msra.mxu0 0.0
        %915 = vmatprep.subr.mxu0 0.0
        %916 = vmatpush1.msra.mxu0 0.0
        %917 = vmatprep.subr.mxu0 0.0
        %918 = vmatpush1.msra.mxu0 0.0
        %919 = vmatprep.subr.mxu0 0.0
        %920 = vmatpush1.msra.mxu0 0.0
        %921 = vmatprep.subr.mxu0 0.0
        %922 = vmatpush1.msra.mxu0 0.0
        %923 = vmatprep.subr.mxu0 0.0
        %924 = vmatpush1.msra.mxu0 0.0
        %925 = vmatprep.subr.mxu0 0.0
        %926 = vmatpush1.msra.mxu0 0.0
        %927 = vmatprep.subr.mxu0 0.0
        %928 = vmatpush1.msra.mxu0 0.0
        %929 = vmatprep.subr.mxu0 0.0
        %930 = vmatpush1.msra.mxu0 0.0
        %931 = vmatprep.subr.mxu0 0.0
        %932 = vmatpush1.msra.mxu0 0.0
        %933 = vmatprep.subr.mxu0 0.0
        %934 = vmatpush1.msra.mxu0 0.0
        %935 = vmatprep.subr.mxu0 0.0
        %936 = vmatpush1.msra.mxu0 0.0
        %937 = vmatprep.subr.mxu0 0.0
        %938 = vmatpush1.msra.mxu0 0.0
        %939 = vmatprep.subr.mxu0 0.0
        %940 = vmatpush1.msra.mxu0 0.0
        %941 = vmatprep.subr.mxu0 0.0
        %942 = vmatpush1.msra.mxu0 0.0
        %943 = vmatprep.subr.mxu0 0.0
        %944 = vmatpush1.msra.mxu0 0.0
        %945 = vmatprep.subr.mxu0 0.0
        %946 = vmatpush1.msra.mxu0 0.0
        %947 = vmatprep.subr.mxu0 0.0
        %948 = vmatpush1.msra.mxu0 0.0
        %949 = vmatprep.subr.mxu0 0.0
        %950 = vmatpush1.msra.mxu0 0.0
        %951 = vmatprep.subr.mxu0 0.0
        %952 = vmatpush1.msra.mxu0 0.0
        %953 = vmatprep.subr.mxu0 0.0
        %954 = vmatpush1.msra.mxu0 0.0
        %955 = vmatprep.subr.mxu0 0.0
        %956 = vmatpush1.msra.mxu0 0.0
        %957 = vmatprep.mubr.f32.mxu0 0.0
        %958 = vmatmul.mubr.f32.gmra.mrb[0].mxu0 %v891
        %v959 = vpop.f32.mrb[0].mxu0
        %v960 = vadd.f32 0.0, %v959
        %v961 = vpop.f32.mrb[0].mxu0
        %962 = vdwg.mxu0
        %964 = vrot.lane.b32.xlu0 %v808, 8
        %v965 = vpop.permute.xlu0 %964
        %968 = vrot.lane.b32.xlu0 %v884, 16
        %v969 = vpop.permute.xlu0 %968
        %972 = vrot.lane.b32.xlu0 %v960, 24
        %v973 = vpop.permute.xlu0 %972
        %v975 = vsel %vm306, %v732, %v965
        %vm976 = vcmask 130048
        %v977 = vsel %vm976, %v975, %v969
        %vm978 = vcmask 195584
        %v979 = vsel %vm978, %v977, %v973
        %v980 = vlaneseq
        %v981 = vshrl.u32 %v980, 7
        %v982 = vsub.s32 0, %v981
        %v983 = vrot.slane %v215, %v982
        %v985 = vsel %vm229, %v979, 0
        %987 = vmatprep.subr.mxu0 0.0
        %988 = vmatpush1.msra.mxu0 %v193
        %989 = vmatprep.subr.mxu0 0.0
        %990 = vmatpush1.msra.mxu0 %v194
        %991 = vmatprep.subr.mxu0 0.0
        %992 = vmatpush1.msra.mxu0 %v195
        %993 = vmatprep.subr.mxu0 0.0
        %994 = vmatpush1.msra.mxu0 %v196
        %995 = vmatprep.subr.mxu0 0.0
        %996 = vmatpush1.msra.mxu0 0.0
        %997 = vmatprep.subr.mxu0 0.0
        %998 = vmatpush1.msra.mxu0 0.0
        %999 = vmatprep.subr.mxu0 0.0
        %1000 = vmatpush1.msra.mxu0 0.0
        %1001 = vmatprep.subr.mxu0 0.0
        %1002 = vmatpush1.msra.mxu0 0.0
        %1003 = vmatprep.subr.mxu0 0.0
        %1004 = vmatpush1.msra.mxu0 0.0
        %1005 = vmatprep.subr.mxu0 0.0
        %1006 = vmatpush1.msra.mxu0 0.0
        %1007 = vmatprep.subr.mxu0 0.0
        %1008 = vmatpush1.msra.mxu0 0.0
        %1009 = vmatprep.subr.mxu0 0.0
        %1010 = vmatpush1.msra.mxu0 0.0
        %1011 = vmatprep.subr.mxu0 0.0
        %1012 = vmatpush1.msra.mxu0 0.0
        %1013 = vmatprep.subr.mxu0 0.0
        %1014 = vmatpush1.msra.mxu0 0.0
        %1015 = vmatprep.subr.mxu0 0.0
        %1016 = vmatpush1.msra.mxu0 0.0
        %1017 = vmatprep.subr.mxu0 0.0
        %1018 = vmatpush1.msra.mxu0 0.0
        %1019 = vmatprep.subr.mxu0 0.0
        %1020 = vmatpush1.msra.mxu0 0.0
        %1021 = vmatprep.subr.mxu0 0.0
        %1022 = vmatpush1.msra.mxu0 0.0
        %1023 = vmatprep.subr.mxu0 0.0
        %1024 = vmatpush1.msra.mxu0 0.0
        %1025 = vmatprep.subr.mxu0 0.0
        %1026 = vmatpush1.msra.mxu0 0.0
        %1027 = vmatprep.subr.mxu0 0.0
        %1028 = vmatpush1.msra.mxu0 0.0
        %1029 = vmatprep.subr.mxu0 0.0
        %1030 = vmatpush1.msra.mxu0 0.0
        %1031 = vmatprep.subr.mxu0 0.0
        %1032 = vmatpush1.msra.mxu0 0.0
        %1033 = vmatprep.subr.mxu0 0.0
        %1034 = vmatpush1.msra.mxu0 0.0
        %1035 = vmatprep.subr.mxu0 0.0
        %1036 = vmatpush1.msra.mxu0 0.0
        %1037 = vmatprep.subr.mxu0 0.0
        %1038 = vmatpush1.msra.mxu0 0.0
        %1039 = vmatprep.subr.mxu0 0.0
        %1040 = vmatpush1.msra.mxu0 0.0
        %1041 = vmatprep.subr.mxu0 0.0
        %1042 = vmatpush1.msra.mxu0 0.0
        %1043 = vmatprep.subr.mxu0 0.0
        %1044 = vmatpush1.msra.mxu0 0.0
        %1045 = vmatprep.subr.mxu0 0.0
        %1046 = vmatpush1.msra.mxu0 0.0
        %1047 = vmatprep.subr.mxu0 0.0
        %1048 = vmatpush1.msra.mxu0 0.0
        %1049 = vmatprep.subr.mxu0 0.0
        %1050 = vmatpush1.msra.mxu0 0.0
        %1051 = vmatprep.mubr.f32.mxu0 0.0
        %1052 = vmatmul.mubr.f32.gmra.mrb[0].mxu0 %v985
        %v1053 = vpop.f32.mrb[0].mxu0
        %v1054 = vadd.f32 %v983, %v1053
        %v1055 = vpop.f32.mrb[0].mxu0
        %1056 = vdwg.mxu0
        %v1057 = vadd.f32 %v183, %v1054
        %v1058 = vsel %vm229, %v1057, 0.0
        %1059 = vadd.xlane.f32.xlu0 %v1058
        %v1060 = vpop.xlane.xlu0 %1059
        %v1061 = vrcp.pop 32.0
        %v1062 = vmul.f32 %v1060, %v1061
        %v1063 = vsub.f32 %v1057, %v1062
        %v1064 = vmul.f32 %v1063, %v1063
        %v1065 = vsel %vm229, %v1064, 0.0
        %1066 = vadd.xlane.f32.xlu0 %v1065
        %v1067 = vpop.xlane.xlu0 %1066
        %v1068 = vmul.f32 %v1067, %v1061
        %v1069 = vadd.f32 %v1068, 1e-05
        %v1070 = vrsqrt.pop %v1069
        %v1071 = vmul.f32 %v1063, %v1070
        %v1072 = vlaneseq
        %v1073 = vshrl.u32 %v1072, 7
        %v1074 = vsub.s32 0, %v1073
        %v1075 = vrot.slane %v219, %v1074
        %v1076 = vmul.f32 %v1071, %v1075
        %v1077 = vlaneseq
        %v1078 = vshrl.u32 %v1077, 7
        %v1079 = vsub.s32 0, %v1078
        %v1080 = vrot.slane %v220, %v1079
        %v1081 = vadd.f32 %v1076, %v1080
        %v1082 = vlaneseq
        %v1083 = vshrl.u32 %v1082, 7
        %v1084 = vsub.s32 0, %v1083
        %v1085 = vrot.slane %v214, %v1084
        %v1087 = vsel %vm229, %v1081, 0
        %1089 = vmatprep.subr.mxu0 0.0
        %1090 = vmatpush1.msra.mxu0 %v189
        %1091 = vmatprep.subr.mxu0 0.0
        %1092 = vmatpush1.msra.mxu0 %v190
        %1093 = vmatprep.subr.mxu0 0.0
        %1094 = vmatpush1.msra.mxu0 %v191
        %1095 = vmatprep.subr.mxu0 0.0
        %1096 = vmatpush1.msra.mxu0 %v192
        %1097 = vmatprep.subr.mxu0 0.0
        %1098 = vmatpush1.msra.mxu0 0.0
        %1099 = vmatprep.subr.mxu0 0.0
        %1100 = vmatpush1.msra.mxu0 0.0
        %1101 = vmatprep.subr.mxu0 0.0
        %1102 = vmatpush1.msra.mxu0 0.0
        %1103 = vmatprep.subr.mxu0 0.0
        %1104 = vmatpush1.msra.mxu0 0.0
        %1105 = vmatprep.subr.mxu0 0.0
        %1106 = vmatpush1.msra.mxu0 0.0
        %1107 = vmatprep.subr.mxu0 0.0
        %1108 = vmatpush1.msra.mxu0 0.0
        %1109 = vmatprep.subr.mxu0 0.0
        %1110 = vmatpush1.msra.mxu0 0.0
        %1111 = vmatprep.subr.mxu0 0.0
        %1112 = vmatpush1.msra.mxu0 0.0
        %1113 = vmatprep.subr.mxu0 0.0
        %1114 = vmatpush1.msra.mxu0 0.0
        %1115 = vmatprep.subr.mxu0 0.0
        %1116 = vmatpush1.msra.mxu0 0.0
        %1117 = vmatprep.subr.mxu0 0.0
        %1118 = vmatpush1.msra.mxu0 0.0
        %1119 = vmatprep.subr.mxu0 0.0
        %1120 = vmatpush1.msra.mxu0 0.0
        %1121 = vmatprep.subr.mxu0 0.0
        %1122 = vmatpush1.msra.mxu0 0.0
        %1123 = vmatprep.subr.mxu0 0.0
        %1124 = vmatpush1.msra.mxu0 0.0
        %1125 = vmatprep.subr.mxu0 0.0
        %1126 = vmatpush1.msra.mxu0 0.0
        %1127 = vmatprep.subr.mxu0 0.0
        %1128 = vmatpush1.msra.mxu0 0.0
        %1129 = vmatprep.subr.mxu0 0.0
        %1130 = vmatpush1.msra.mxu0 0.0
        %1131 = vmatprep.subr.mxu0 0.0
        %1132 = vmatpush1.msra.mxu0 0.0
        %1133 = vmatprep.subr.mxu0 0.0
        %1134 = vmatpush1.msra.mxu0 0.0
        %1135 = vmatprep.subr.mxu0 0.0
        %1136 = vmatpush1.msra.mxu0 0.0
        %1137 = vmatprep.subr.mxu0 0.0
        %1138 = vmatpush1.msra.mxu0 0.0
        %1139 = vmatprep.subr.mxu0 0.0
        %1140 = vmatpush1.msra.mxu0 0.0
        %1141 = vmatprep.subr.mxu0 0.0
        %1142 = vmatpush1.msra.mxu0 0.0
        %1143 = vmatprep.subr.mxu0 0.0
        %1144 = vmatpush1.msra.mxu0 0.0
        %1145 = vmatprep.subr.mxu0 0.0
        %1146 = vmatpush1.msra.mxu0 0.0
        %1147 = vmatprep.subr.mxu0 0.0
        %1148 = vmatpush1.msra.mxu0 0.0
        %1149 = vmatprep.subr.mxu0 0.0
        %1150 = vmatpush1.msra.mxu0 0.0
        %1151 = vmatprep.subr.mxu0 0.0
        %1152 = vmatpush1.msra.mxu0 0.0
        %1153 = vmatprep.mubr.f32.mxu0 0.0
        %1154 = vmatmul.mubr.f32.gmra.mrb[0].mxu0 %v1087
        %v1155 = vpop.f32.mrb[0].mxu0
        %v1156 = vadd.f32 %v1085, %v1155
        %v1157 = vpop.f32.mrb[0].mxu0
        %1158 = vdwg.mxu0
        %1163 = vrot.lane.b32.xlu0 %v189, 96
        %v1164 = vpop.permute.xlu0 %1163
        %1165 = vrot.lane.b32.xlu0 %v190, 96
        %v1166 = vpop.permute.xlu0 %1165
        %1167 = vrot.lane.b32.xlu0 %v191, 96
        %v1168 = vpop.permute.xlu0 %1167
        %1169 = vrot.lane.b32.xlu0 %v192, 96
        %v1170 = vpop.permute.xlu0 %1169
        %1176 = vrot.lane.b32.xlu0 %v1085, 96
        %v1177 = vpop.permute.xlu0 %1176
        %v1180 = vsel %vm229, %v184, 0
        %1182 = vmatprep.subr.mxu0 0.0
        %1183 = vmatpush1.msra.mxu0 %v1164
        %1184 = vmatprep.subr.mxu0 0.0
        %1185 = vmatpush1.msra.mxu0 %v1166
        %1186 = vmatprep.subr.mxu0 0.0
        %1187 = vmatpush1.msra.mxu0 %v1168
        %1188 = vmatprep.subr.mxu0 0.0
        %1189 = vmatpush1.msra.mxu0 %v1170
        %1190 = vmatprep.subr.mxu0 0.0
        %1191 = vmatpush1.msra.mxu0 0.0
        %1192 = vmatprep.subr.mxu0 0.0
        %1193 = vmatpush1.msra.mxu0 0.0
        %1194 = vmatprep.subr.mxu0 0.0
        %1195 = vmatpush1.msra.mxu0 0.0
        %1196 = vmatprep.subr.mxu0 0.0
        %1197 = vmatpush1.msra.mxu0 0.0
        %1198 = vmatprep.subr.mxu0 0.0
        %1199 = vmatpush1.msra.mxu0 0.0
        %1200 = vmatprep.subr.mxu0 0.0
        %1201 = vmatpush1.msra.mxu0 0.0
        %1202 = vmatprep.subr.mxu0 0.0
        %1203 = vmatpush1.msra.mxu0 0.0
        %1204 = vmatprep.subr.mxu0 0.0
        %1205 = vmatpush1.msra.mxu0 0.0
        %1206 = vmatprep.subr.mxu0 0.0
        %1207 = vmatpush1.msra.mxu0 0.0
        %1208 = vmatprep.subr.mxu0 0.0
        %1209 = vmatpush1.msra.mxu0 0.0
        %1210 = vmatprep.subr.mxu0 0.0
        %1211 = vmatpush1.msra.mxu0 0.0
        %1212 = vmatprep.subr.mxu0 0.0
        %1213 = vmatpush1.msra.mxu0 0.0
        %1214 = vmatprep.subr.mxu0 0.0
        %1215 = vmatpush1.msra.mxu0 0.0
        %1216 = vmatprep.subr.mxu0 0.0
        %1217 = vmatpush1.msra.mxu0 0.0
        %1218 = vmatprep.subr.mxu0 0.0
        %1219 = vmatpush1.msra.mxu0 0.0
        %1220 = vmatprep.subr.mxu0 0.0
        %1221 = vmatpush1.msra.mxu0 0.0
        %1222 = vmatprep.subr.mxu0 0.0
        %1223 = vmatpush1.msra.mxu0 0.0
        %1224 = vmatprep.subr.mxu0 0.0
        %1225 = vmatpush1.msra.mxu0 0.0
        %1226 = vmatprep.subr.mxu0 0.0
        %1227 = vmatpush1.msra.mxu0 0.0
        %1228 = vmatprep.subr.mxu0 0.0
        %1229 = vmatpush1.msra.mxu0 0.0
        %1230 = vmatprep.subr.mxu0 0.0
        %1231 = vmatpush1.msra.mxu0 0.0
        %1232 = vmatprep.subr.mxu0 0.0
        %1233 = vmatpush1.msra.mxu0 0.0
        %1234 = vmatprep.subr.mxu0 0.0
        %1235 = vmatpush1.msra.mxu0 0.0
        %1236 = vmatprep.subr.mxu0 0.0
        %1237 = vmatpush1.msra.mxu0 0.0
        %1238 = vmatprep.subr.mxu0 0.0
        %1239 = vmatpush1.msra.mxu0 0.0
        %1240 = vmatprep.subr.mxu0 0.0
        %1241 = vmatpush1.msra.mxu0 0.0
        %1242 = vmatprep.subr.mxu0 0.0
        %1243 = vmatpush1.msra.mxu0 0.0
        %1244 = vmatprep.subr.mxu0 0.0
        %1245 = vmatpush1.msra.mxu0 0.0
        %1246 = vmatprep.mubr.f32.mxu0 0.0
        %1247 = vmatmul.mubr.f32.gmra.mrb[0].mxu0 %v1180
        %v1248 = vpop.f32.mrb[0].mxu0
        %v1249 = vadd.f32 %v1177, %v1248
        %v1250 = vpop.f32.mrb[0].mxu0
        %1251 = vdwg.mxu0
        %v1253 = vsel %vm306, %v1156, 0
        %v1256 = vsel %vm306, %v1249, 0
        %1258 = vmatprep.subr.mxu0 0.0
        %1259 = vmatpush1.xpose.msra.mxu0 %v1256
        %1260 = vmatprep.subr.mxu0 0.0
        %1261 = vmatpush1.xpose.msra.mxu0 0.0
        %1262 = vmatprep.subr.mxu0 0.0
        %1263 = vmatpush1.xpose.msra.mxu0 0.0
        %1264 = vmatprep.subr.mxu0 0.0
        %1265 = vmatpush1.xpose.msra.mxu0 0.0
        %1266 = vmatprep.subr.mxu0 0.0
        %1267 = vmatpush1.xpose.msra.mxu0 0.0
        %1268 = vmatprep.subr.mxu0 0.0
        %1269 = vmatpush1.xpose.msra.mxu0 0.0
        %1270 = vmatprep.subr.mxu0 0.0
        %1271 = vmatpush1.xpose.msra.mxu0 0.0
        %1272 = vmatprep.subr.mxu0 0.0
        %1273 = vmatpush1.xpose.msra.mxu0 0.0
        %1274 = vmatprep.subr.mxu0 0.0
        %1275 = vmatpush1.xpose.msra.mxu0 0.0
        %1276 = vmatprep.subr.mxu0 0.0
        %1277 = vmatpush1.xpose.msra.mxu0 0.0
        %1278 = vmatprep.subr.mxu0 0.0
        %1279 = vmatpush1.xpose.msra.mxu0 0.0
        %1280 = vmatprep.subr.mxu0 0.0
        %1281 = vmatpush1.xpose.msra.mxu0 0.0
        %1282 = vmatprep.subr.mxu0 0.0
        %1283 = vmatpush1.xpose.msra.mxu0 0.0
        %1284 = vmatprep.subr.mxu0 0.0
        %1285 = vmatpush1.xpose.msra.mxu0 0.0
        %1286 = vmatprep.subr.mxu0 0.0
        %1287 = vmatpush1.xpose.msra.mxu0 0.0
        %1288 = vmatprep.subr.mxu0 0.0
        %1289 = vmatpush1.xpose.msra.mxu0 0.0
        %1290 = vmatprep.subr.mxu0 0.0
        %1291 = vmatpush1.xpose.msra.mxu0 0.0
        %1292 = vmatprep.subr.mxu0 0.0
        %1293 = vmatpush1.xpose.msra.mxu0 0.0
        %1294 = vmatprep.subr.mxu0 0.0
        %1295 = vmatpush1.xpose.msra.mxu0 0.0
        %1296 = vmatprep.subr.mxu0 0.0
        %1297 = vmatpush1.xpose.msra.mxu0 0.0
        %1298 = vmatprep.subr.mxu0 0.0
        %1299 = vmatpush1.xpose.msra.mxu0 0.0
        %1300 = vmatprep.subr.mxu0 0.0
        %1301 = vmatpush1.xpose.msra.mxu0 0.0
        %1302 = vmatprep.subr.mxu0 0.0
        %1303 = vmatpush1.xpose.msra.mxu0 0.0
        %1304 = vmatprep.subr.mxu0 0.0
        %1305 = vmatpush1.xpose.msra.mxu0 0.0
        %1306 = vmatprep.subr.mxu0 0.0
        %1307 = vmatpush1.xpose.msra.mxu0 0.0
        %1308 = vmatprep.subr.mxu0 0.0
        %1309 = vmatpush1.xpose.msra.mxu0 0.0
        %1310 = vmatprep.subr.mxu0 0.0
        %1311 = vmatpush1.xpose.msra.mxu0 0.0
        %1312 = vmatprep.subr.mxu0 0.0
        %1313 = vmatpush1.xpose.msra.mxu0 0.0
        %1314 = vmatprep.subr.mxu0 0.0
        %1315 = vmatpush1.xpose.msra.mxu0 0.0
        %1316 = vmatprep.subr.mxu0 0.0
        %1317 = vmatpush1.xpose.msra.mxu0 0.0
        %1318 = vmatprep.subr.mxu0 0.0
        %1319 = vmatpush1.xpose.msra.mxu0 0.0
        %1320 = vmatprep.subr.mxu0 0.0
        %1321 = vmatpush1.xpose.msra.mxu0 0.0
        %1322 = vmatprep.mubr.f32.mxu0 0.0
        %1323 = vmatmul.mubr.f32.gmra.mrb[0].mxu0 %v1253
        %v1324 = vpop.f32.mrb[0].mxu0
        %v1325 = vadd.f32 0.0, %v1324
        %v1326 = vpop.f32.mrb[0].mxu0
        %1327 = vdwg.mxu0
        %1328 = vrot.lane.b32.xlu0 %v1156, 120
        %v1329 = vpop.permute.xlu0 %1328
        %1330 = vrot.lane.b32.xlu0 %v1249, 120
        %v1331 = vpop.permute.xlu0 %1330
        %v1332 = vsel %vm306, %v1329, 0
        %v1334 = vsel %vm306, %v1331, 0
        %1336 = vmatprep.subr.mxu0 0.0
        %1337 = vmatpush1.xpose.msra.mxu0 %v1334
        %1338 = vmatprep.subr.mxu0 0.0
        %1339 = vmatpush1.xpose.msra.mxu0 0.0
        %1340 = vmatprep.subr.mxu0 0.0
        %1341 = vmatpush1.xpose.msra.mxu0 0.0
        %1342 = vmatprep.subr.mxu0 0.0
        %1343 = vmatpush1.xpose.msra.mxu0 0.0
        %1344 = vmatprep.subr.mxu0 0.0
        %1345 = vmatpush1.xpose.msra.mxu0 0.0
        %1346 = vmatprep.subr.mxu0 0.0
        %1347 = vmatpush1.xpose.msra.mxu0 0.0
        %1348 = vmatprep.subr.mxu0 0.0
        %1349 = vmatpush1.xpose.msra.mxu0 0.0
        %1350 = vmatprep.subr.mxu0 0.0
        %1351 = vmatpush1.xpose.msra.mxu0 0.0
        %1352 = vmatprep.subr.mxu0 0.0
        %1353 = vmatpush1.xpose.msra.mxu0 0.0
        %1354 = vmatprep.subr.mxu0 0.0
        %1355 = vmatpush1.xpose.msra.mxu0 0.0
        %1356 = vmatprep.subr.mxu0 0.0
        %1357 = vmatpush1.xpose.msra.mxu0 0.0
        %1358 = vmatprep.subr.mxu0 0.0
        %1359 = vmatpush1.xpose.msra.mxu0 0.0
        %1360 = vmatprep.subr.mxu0 0.0
        %1361 = vmatpush1.xpose.msra.mxu0 0.0
        %1362 = vmatprep.subr.mxu0 0.0
        %1363 = vmatpush1.xpose.msra.mxu0 0.0
        %1364 = vmatprep.subr.mxu0 0.0
        %1365 = vmatpush1.xpose.msra.mxu0 0.0
        %1366 = vmatprep.subr.mxu0 0.0
        %1367 = vmatpush1.xpose.msra.mxu0 0.0
        %1368 = vmatprep.subr.mxu0 0.0
        %1369 = vmatpush1.xpose.msra.mxu0 0.0
        %1370 = vmatprep.subr.mxu0 0.0
        %1371 = vmatpush1.xpose.msra.mxu0 0.0
        %1372 = vmatprep.subr.mxu0 0.0
        %1373 = vmatpush1.xpose.msra.mxu0 0.0
        %1374 = vmatprep.subr.mxu0 0.0
        %1375 = vmatpush1.xpose.msra.mxu0 0.0
        %1376 = vmatprep.subr.mxu0 0.0
        %1377 = vmatpush1.xpose.msra.mxu0 0.0
        %1378 = vmatprep.subr.mxu0 0.0
        %1379 = vmatpush1.xpose.msra.mxu0 0.0
        %1380 = vmatprep.subr.mxu0 0.0
        %1381 = vmatpush1.xpose.msra.mxu0 0.0
        %1382 = vmatprep.subr.mxu0 0.0
        %1383 = vmatpush1.xpose.msra.mxu0 0.0
        %1384 = vmatprep.subr.mxu0 0.0
        %1385 = vmatpush1.xpose.msra.mxu0 0.0
        %1386 = vmatprep.subr.mxu0 0.0
        %1387 = vmatpush1.xpose.msra.mxu0 0.0
        %1388 = vmatprep.subr.mxu0 0.0
        %1389 = vmatpush1.xpose.msra.mxu0 0.0
        %1390 = vmatprep.subr.mxu0 0.0
        %1391 = vmatpush1.xpose.msra.mxu0 0.0
        %1392 = vmatprep.subr.mxu0 0.0
        %1393 = vmatpush1.xpose.msra.mxu0 0.0
        %1394 = vmatprep.subr.mxu0 0.0
        %1395 = vmatpush1.xpose.msra.mxu0 0.0
        %1396 = vmatprep.subr.mxu0 0.0
        %1397 = vmatpush1.xpose.msra.mxu0 0.0
        %1398 = vmatprep.subr.mxu0 0.0
        %1399 = vmatpush1.xpose.msra.mxu0 0.0
        %1400 = vmatprep.mubr.f32.mxu0 0.0
        %1401 = vmatmul.mubr.f32.gmra.mrb[0].mxu0 %v1332
        %v1402 = vpop.f32.mrb[0].mxu0
        %v1403 = vadd.f32 0.0, %v1402
        %v1404 = vpop.f32.mrb[0].mxu0
        %1405 = vdwg.mxu0
        %1406 = vrot.lane.b32.xlu0 %v1156, 112
        %v1407 = vpop.permute.xlu0 %1406
        %1408 = vrot.lane.b32.xlu0 %v1249, 112
        %v1409 = vpop.permute.xlu0 %1408
        %v1410 = vsel %vm306, %v1407, 0
        %v1412 = vsel %vm306, %v1409, 0
        %1414 = vmatprep.subr.mxu0 0.0
        %1415 = vmatpush1.xpose.msra.mxu0 %v1412
        %1416 = vmatprep.subr.mxu0 0.0
        %1417 = vmatpush1.xpose.msra.mxu0 0.0
        %1418 = vmatprep.subr.mxu0 0.0
        %1419 = vmatpush1.xpose.msra.mxu0 0.0
        %1420 = vmatprep.subr.mxu0 0.0
        %1421 = vmatpush1.xpose.msra.mxu0 0.0
        %1422 = vmatprep.subr.mxu0 0.0
        %1423 = vmatpush1.xpose.msra.mxu0 0.0
        %1424 = vmatprep.subr.mxu0 0.0
        %1425 = vmatpush1.xpose.msra.mxu0 0.0
        %1426 = vmatprep.subr.mxu0 0.0
        %1427 = vmatpush1.xpose.msra.mxu0 0.0
        %1428 = vmatprep.subr.mxu0 0.0
        %1429 = vmatpush1.xpose.msra.mxu0 0.0
        %1430 = vmatprep.subr.mxu0 0.0
        %1431 = vmatpush1.xpose.msra.mxu0 0.0
        %1432 = vmatprep.subr.mxu0 0.0
        %1433 = vmatpush1.xpose.msra.mxu0 0.0
        %1434 = vmatprep.subr.mxu0 0.0
        %1435 = vmatpush1.xpose.msra.mxu0 0.0
        %1436 = vmatprep.subr.mxu0 0.0
        %1437 = vmatpush1.xpose.msra.mxu0 0.0
        %1438 = vmatprep.subr.mxu0 0.0
        %1439 = vmatpush1.xpose.msra.mxu0 0.0
        %1440 = vmatprep.subr.mxu0 0.0
        %1441 = vmatpush1.xpose.msra.mxu0 0.0
        %1442 = vmatprep.subr.mxu0 0.0
        %1443 = vmatpush1.xpose.msra.mxu0 0.0
        %1444 = vmatprep.subr.mxu0 0.0
        %1445 = vmatpush1.xpose.msra.mxu0 0.0
        %1446 = vmatprep.subr.mxu0 0.0
        %1447 = vmatpush1.xpose.msra.mxu0 0.0
        %1448 = vmatprep.subr.mxu0 0.0
        %1449 = vmatpush1.xpose.msra.mxu0 0.0
        %1450 = vmatprep.subr.mxu0 0.0
        %1451 = vmatpush1.xpose.msra.mxu0 0.0
        %1452 = vmatprep.subr.mxu0 0.0
        %1453 = vmatpush1.xpose.msra.mxu0 0.0
        %1454 = vmatprep.subr.mxu0 0.0
        %1455 = vmatpush1.xpose.msra.mxu0 0.0
        %1456 = vmatprep.subr.mxu0 0.0
        %1457 = vmatpush1.xpose.msra.mxu0 0.0
        %1458 = vmatprep.subr.mxu0 0.0
        %1459 = vmatpush1.xpose.msra.mxu0 0.0
        %1460 = vmatprep.subr.mxu0 0.0
        %1461 = vmatpush1.xpose.msra.mxu0 0.0
        %1462 = vmatprep.subr.mxu0 0.0
        %1463 = vmatpush1.xpose.msra.mxu0 0.0
        %1464 = vmatprep.subr.mxu0 0.0
        %1465 = vmatpush1.xpose.msra.mxu0 0.0
        %1466 = vmatprep.subr.mxu0 0.0
        %1467 = vmatpush1.xpose.msra.mxu0 0.0
        %1468 = vmatprep.subr.mxu0 0.0
        %1469 = vmatpush1.xpose.msra.mxu0 0.0
        %1470 = vmatprep.subr.mxu0 0.0
        %1471 = vmatpush1.xpose.msra.mxu0 0.0
        %1472 = vmatprep.subr.mxu0 0.0
        %1473 = vmatpush1.xpose.msra.mxu0 0.0
        %1474 = vmatprep.subr.mxu0 0.0
        %1475 = vmatpush1.xpose.msra.mxu0 0.0
        %1476 = vmatprep.subr.mxu0 0.0
        %1477 = vmatpush1.xpose.msra.mxu0 0.0
        %1478 = vmatprep.mubr.f32.mxu0 0.0
        %1479 = vmatmul.mubr.f32.gmra.mrb[0].mxu0 %v1410
        %v1480 = vpop.f32.mrb[0].mxu0
        %v1481 = vadd.f32 0.0, %v1480
        %v1482 = vpop.f32.mrb[0].mxu0
        %1483 = vdwg.mxu0
        %1484 = vrot.lane.b32.xlu0 %v1156, 104
        %v1485 = vpop.permute.xlu0 %1484
        %1486 = vrot.lane.b32.xlu0 %v1249, 104
        %v1487 = vpop.permute.xlu0 %1486
        %v1488 = vsel %vm306, %v1485, 0
        %v1490 = vsel %vm306, %v1487, 0
        %1492 = vmatprep.subr.mxu0 0.0
        %1493 = vmatpush1.xpose.msra.mxu0 %v1490
        %1494 = vmatprep.subr.mxu0 0.0
        %1495 = vmatpush1.xpose.msra.mxu0 0.0
        %1496 = vmatprep.subr.mxu0 0.0
        %1497 = vmatpush1.xpose.msra.mxu0 0.0
        %1498 = vmatprep.subr.mxu0 0.0
        %1499 = vmatpush1.xpose.msra.mxu0 0.0
        %1500 = vmatprep.subr.mxu0 0.0
        %1501 = vmatpush1.xpose.msra.mxu0 0.0
        %1502 = vmatprep.subr.mxu0 0.0
        %1503 = vmatpush1.xpose.msra.mxu0 0.0
        %1504 = vmatprep.subr.mxu0 0.0
        %1505 = vmatpush1.xpose.msra.mxu0 0.0
        %1506 = vmatprep.subr.mxu0 0.0
        %1507 = vmatpush1.xpose.msra.mxu0 0.0
        %1508 = vmatprep.subr.mxu0 0.0
        %1509 = vmatpush1.xpose.msra.mxu0 0.0
        %1510 = vmatprep.subr.mxu0 0.0
        %1511 = vmatpush1.xpose.msra.mxu0 0.0
        %1512 = vmatprep.subr.mxu0 0.0
        %1513 = vmatpush1.xpose.msra.mxu0 0.0
        %1514 = vmatprep.subr.mxu0 0.0
        %1515 = vmatpush1.xpose.msra.mxu0 0.0
        %1516 = vmatprep.subr.mxu0 0.0
        %1517 = vmatpush1.xpose.msra.mxu0 0.0
        %1518 = vmatprep.subr.mxu0 0.0
        %1519 = vmatpush1.xpose.msra.mxu0 0.0
        %1520 = vmatprep.subr.mxu0 0.0
        %1521 = vmatpush1.xpose.msra.mxu0 0.0
        %1522 = vmatprep.subr.mxu0 0.0
        %1523 = vmatpush1.xpose.msra.mxu0 0.0
        %1524 = vmatprep.subr.mxu0 0.0
        %1525 = vmatpush1.xpose.msra.mxu0 0.0
        %1526 = vmatprep.subr.mxu0 0.0
        %1527 = vmatpush1.xpose.msra.mxu0 0.0
        %1528 = vmatprep.subr.mxu0 0.0
        %1529 = vmatpush1.xpose.msra.mxu0 0.0
        %1530 = vmatprep.subr.mxu0 0.0
        %1531 = vmatpush1.xpose.msra.mxu0 0.0
        %1532 = vmatprep.subr.mxu0 0.0
        %1533 = vmatpush1.xpose.msra.mxu0 0.0
        %1534 = vmatprep.subr.mxu0 0.0
        %1535 = vmatpush1.xpose.msra.mxu0 0.0
        %1536 = vmatprep.subr.mxu0 0.0
        %1537 = vmatpush1.xpose.msra.mxu0 0.0
        %1538 = vmatprep.subr.mxu0 0.0
        %1539 = vmatpush1.xpose.msra.mxu0 0.0
        %1540 = vmatprep.subr.mxu0 0.0
        %1541 = vmatpush1.xpose.msra.mxu0 0.0
        %1542 = vmatprep.subr.mxu0 0.0
        %1543 = vmatpush1.xpose.msra.mxu0 0.0
        %1544 = vmatprep.subr.mxu0 0.0
        %1545 = vmatpush1.xpose.msra.mxu0 0.0
        %1546 = vmatprep.subr.mxu0 0.0
        %1547 = vmatpush1.xpose.msra.mxu0 0.0
        %1548 = vmatprep.subr.mxu0 0.0
        %1549 = vmatpush1.xpose.msra.mxu0 0.0
        %1550 = vmatprep.subr.mxu0 0.0
        %1551 = vmatpush1.xpose.msra.mxu0 0.0
        %1552 = vmatprep.subr.mxu0 0.0
        %1553 = vmatpush1.xpose.msra.mxu0 0.0
        %1554 = vmatprep.subr.mxu0 0.0
        %1555 = vmatpush1.xpose.msra.mxu0 0.0
        %1556 = vmatprep.mubr.f32.mxu0 0.0
        %1557 = vmatmul.mubr.f32.gmra.mrb[0].mxu0 %v1488
        %v1558 = vpop.f32.mrb[0].mxu0
        %v1559 = vadd.f32 0.0, %v1558
        %v1560 = vpop.f32.mrb[0].mxu0
        %1561 = vdwg.mxu0
        %v1562 = vsel %vm306, %v1325, -inf
        %1563 = vmax.xlane.f32.xlu0 %v1562
        %v1564 = vpop.xlane.xlu0 %1563
        %v1565 = vsel %vm306, %v1403, -inf
        %1566 = vmax.xlane.f32.xlu0 %v1565
        %v1567 = vpop.xlane.xlu0 %1566
        %v1568 = vsel %vm306, %v1481, -inf
        %1569 = vmax.xlane.f32.xlu0 %v1568
        %v1570 = vpop.xlane.xlu0 %1569
        %v1571 = vsel %vm306, %v1559, -inf
        %1572 = vmax.xlane.f32.xlu0 %v1571
        %v1573 = vpop.xlane.xlu0 %1572
        %v1574 = vsub.f32 %v1325, %v1564
        %v1575 = vsub.f32 %v1403, %v1567
        %v1576 = vsub.f32 %v1481, %v1570
        %v1577 = vsub.f32 %v1559, %v1573
        %v1578 = vmul.f32 %v1574, 1.442695
        %v1579 = vpow.pop %v1578
        %v1580 = vmul.f32 %v1575, 1.442695
        %v1581 = vpow.pop %v1580
        %v1582 = vmul.f32 %v1576, 1.442695
        %v1583 = vpow.pop %v1582
        %v1584 = vmul.f32 %v1577, 1.442695
        %v1585 = vpow.pop %v1584
        %v1586 = vsel %vm306, %v1579, 0.0
        %1587 = vadd.xlane.f32.xlu0 %v1586
        %v1588 = vpop.xlane.xlu0 %1587
        %v1589 = vsel %vm306, %v1581, 0.0
        %1590 = vadd.xlane.f32.xlu0 %v1589
        %v1591 = vpop.xlane.xlu0 %1590
        %v1592 = vsel %vm306, %v1583, 0.0
        %1593 = vadd.xlane.f32.xlu0 %v1592
        %v1594 = vpop.xlane.xlu0 %1593
        %v1595 = vsel %vm306, %v1585, 0.0
        %1596 = vadd.xlane.f32.xlu0 %v1595
        %v1597 = vpop.xlane.xlu0 %1596
        %v1598 = vrcp.pop %v1588
        %v1599 = vrcp.pop %v1591
        %v1600 = vrcp.pop %v1594
        %v1601 = vrcp.pop %v1597
        %v1602 = vmul.f32 %v1579, %v1598
        %v1603 = vmul.f32 %v1581, %v1599
        %v1604 = vmul.f32 %v1583, %v1600
        %v1605 = vmul.f32 %v1585, %v1601
        %1606 = vrot.lane.b32.xlu0 %v1249, 96
        %v1607 = vpop.permute.xlu0 %1606
        %v1610 = vsel %vm306, %v1602, 0
        %1612 = vmatprep.subr.mxu0 0.0
        %1613 = vmatpush1.msra.mxu0 %v1607
        %1614 = vmatprep.subr.mxu0 0.0
        %1615 = vmatpush1.msra.mxu0 0.0
        %1616 = vmatprep.subr.mxu0 0.0
        %1617 = vmatpush1.msra.mxu0 0.0
        %1618 = vmatprep.subr.mxu0 0.0
        %1619 = vmatpush1.msra.mxu0 0.0
        %1620 = vmatprep.subr.mxu0 0.0
        %1621 = vmatpush1.msra.mxu0 0.0
        %1622 = vmatprep.subr.mxu0 0.0
        %1623 = vmatpush1.msra.mxu0 0.0
        %1624 = vmatprep.subr.mxu0 0.0
        %1625 = vmatpush1.msra.mxu0 0.0
        %1626 = vmatprep.subr.mxu0 0.0
        %1627 = vmatpush1.msra.mxu0 0.0
        %1628 = vmatprep.subr.mxu0 0.0
        %1629 = vmatpush1.msra.mxu0 0.0
        %1630 = vmatprep.subr.mxu0 0.0
        %1631 = vmatpush1.msra.mxu0 0.0
        %1632 = vmatprep.subr.mxu0 0.0
        %1633 = vmatpush1.msra.mxu0 0.0
        %1634 = vmatprep.subr.mxu0 0.0
        %1635 = vmatpush1.msra.mxu0 0.0
        %1636 = vmatprep.subr.mxu0 0.0
        %1637 = vmatpush1.msra.mxu0 0.0
        %1638 = vmatprep.subr.mxu0 0.0
        %1639 = vmatpush1.msra.mxu0 0.0
        %1640 = vmatprep.subr.mxu0 0.0
        %1641 = vmatpush1.msra.mxu0 0.0
        %1642 = vmatprep.subr.mxu0 0.0
        %1643 = vmatpush1.msra.mxu0 0.0
        %1644 = vmatprep.subr.mxu0 0.0
        %1645 = vmatpush1.msra.mxu0 0.0
        %1646 = vmatprep.subr.mxu0 0.0
        %1647 = vmatpush1.msra.mxu0 0.0
        %1648 = vmatprep.subr.mxu0 0.0
        %1649 = vmatpush1.msra.mxu0 0.0
        %1650 = vmatprep.subr.mxu0 0.0
        %1651 = vmatpush1.msra.mxu0 0.0
        %1652 = vmatprep.subr.mxu0 0.0
        %1653 = vmatpush1.msra.mxu0 0.0
        %1654 = vmatprep.subr.mxu0 0.0
        %1655 = vmatpush1.msra.mxu0 0.0
        %1656 = vmatprep.subr.mxu0 0.0
        %1657 = vmatpush1.msra.mxu0 0.0
        %1658 = vmatprep.subr.mxu0 0.0
        %1659 = vmatpush1.msra.mxu0 0.0
        %1660 = vmatprep.subr.mxu0 0.0
        %1661 = vmatpush1.msra.mxu0 0.0
        %1662 = vmatprep.subr.mxu0 0.0
        %1663 = vmatpush1.msra.mxu0 0.0
        %1664 = vmatprep.subr.mxu0 0.0
        %1665 = vmatpush1.msra.mxu0 0.0
        %1666 = vmatprep.subr.mxu0 0.0
        %1667 = vmatpush1.msra.mxu0 0.0
        %1668 = vmatprep.subr.mxu0 0.0
        %1669 = vmatpush1.msra.mxu0 0.0
        %1670 = vmatprep.subr.mxu0 0.0
        %1671 = vmatpush1.msra.mxu0 0.0
        %1672 = vmatprep.subr.mxu0 0.0
        %1673 = vmatpush1.msra.mxu0 0.0
        %1674 = vmatprep.subr.mxu0 0.0
        %1675 = vmatpush1.msra.mxu0 0.0
        %1676 = vmatprep.mubr.f32.mxu0 0.0
        %1677 = vmatmul.mubr.f32.gmra.mrb[0].mxu0 %v1610
        %v1678 = vpop.f32.mrb[0].mxu0
        %v1679 = vadd.f32 0.0, %v1678
        %v1680 = vpop.f32.mrb[0].mxu0
        %1681 = vdwg.mxu0
        %1682 = vrot.lane.b32.xlu0 %v1249, 88
        %v1683 = vpop.permute.xlu0 %1682
        %v1686 = vsel %vm306, %v1603, 0
        %1688 = vmatprep.subr.mxu0 0.0
        %1689 = vmatpush1.msra.mxu0 %v1683
        %1690 = vmatprep.subr.mxu0 0.0
        %1691 = vmatpush1.msra.mxu0 0.0
        %1692 = vmatprep.subr.mxu0 0.0
        %1693 = vmatpush1.msra.mxu0 0.0
        %1694 = vmatprep.subr.mxu0 0.0
        %1695 = vmatpush1.msra.mxu0 0.0
        %1696 = vmatprep.subr.mxu0 0.0
        %1697 = vmatpush1.msra.mxu0 0.0
        %1698 = vmatprep.subr.mxu0 0.0
        %1699 = vmatpush1.msra.mxu0 0.0
        %1700 = vmatprep.subr.mxu0 0.0
        %1701 = vmatpush1.msra.mxu0 0.0
        %1702 = vmatprep.subr.mxu0 0.0
        %1703 = vmatpush1.msra.mxu0 0.0
        %1704 = vmatprep.subr.mxu0 0.0
        %1705 = vmatpush1.msra.mxu0 0.0
        %1706 = vmatprep.subr.mxu0 0.0
        %1707 = vmatpush1.msra.mxu0 0.0
        %1708 = vmatprep.subr.mxu0 0.0
        %1709 = vmatpush1.msra.mxu0 0.0
        %1710 = vmatprep.subr.mxu0 0.0
        %1711 = vmatpush1.msra.mxu0 0.0
        %1712 = vmatprep.subr.mxu0 0.0
        %1713 = vmatpush1.msra.mxu0 0.0
        %1714 = vmatprep.subr.mxu0 0.0
        %1715 = vmatpush1.msra.mxu0 0.0
        %1716 = vmatprep.subr.mxu0 0.0
        %1717 = vmatpush1.msra.mxu0 0.0
        %1718 = vmatprep.subr.mxu0 0.0
        %1719 = vmatpush1.msra.mxu0 0.0
        %1720 = vmatprep.subr.mxu0 0.0
        %1721 = vmatpush1.msra.mxu0 0.0
        %1722 = vmatprep.subr.mxu0 0.0
        %1723 = vmatpush1.msra.mxu0 0.0
        %1724 = vmatprep.subr.mxu0 0.0
        %1725 = vmatpush1.msra.mxu0 0.0
        %1726 = vmatprep.subr.mxu0 0.0
        %1727 = vmatpush1.msra.mxu0 0.0
        %1728 = vmatprep.subr.mxu0 0.0
        %1729 = vmatpush1.msra.mxu0 0.0
        %1730 = vmatprep.subr.mxu0 0.0
        %1731 = vmatpush1.msra.mxu0 0.0
        %1732 = vmatprep.subr.mxu0 0.0
        %1733 = vmatpush1.msra.mxu0 0.0
        %1734 = vmatprep.subr.mxu0 0.0
        %1735 = vmatpush1.msra.mxu0 0.0
        %1736 = vmatprep.subr.mxu0 0.0
        %1737 = vmatpush1.msra.mxu0 0.0
        %1738 = vmatprep.subr.mxu0 0.0
        %1739 = vmatpush1.msra.mxu0 0.0
        %1740 = vmatprep.subr.mxu0 0.0
        %1741 = vmatpush1.msra.mxu0 0.0
        %1742 = vmatprep.subr.mxu0 0.0
        %1743 = vmatpush1.msra.mxu0 0.0
        %1744 = vmatprep.subr.mxu0 0.0
        %1745 = vmatpush1.msra.mxu0 0.0
        %1746 = vmatprep.subr.mxu0 0.0
        %1747 = vmatpush1.msra.mxu0 0.0
        %1748 = vmatprep.subr.mxu0 0.0
        %1749 = vmatpush1.msra.mxu0 0.0
        %1750 = vmatprep.subr.mxu0 0.0
        %1751 = vmatpush1.msra.mxu0 0.0
        %1752 = vmatprep.mubr.f32.mxu0 0.0
        %1753 = vmatmul.mubr.f32.gmra.mrb[0].mxu0 %v1686
        %v1754 = vpop.f32.mrb[0].mxu0
        %v1755 = vadd.f32 0.0, %v1754
        %v1756 = vpop.f32.mrb[0].mxu0
        %1757 = vdwg.mxu0
        %1758 = vrot.lane.b32.xlu0 %v1249, 80
        %v1759 = vpop.permute.xlu0 %1758
        %v1762 = vsel %vm306, %v1604, 0
        %1764 = vmatprep.subr.mxu0 0.0
        %1765 = vmatpush1.msra.mxu0 %v1759
        %1766 = vmatprep.subr.mxu0 0.0
        %1767 = vmatpush1.msra.mxu0 0.0
        %1768 = vmatprep.subr.mxu0 0.0
        %1769 = vmatpush1.msra.mxu0 0.0
        %1770 = vmatprep.subr.mxu0 0.0
        %1771 = vmatpush1.msra.mxu0 0.0
        %1772 = vmatprep.subr.mxu0 0.0
        %1773 = vmatpush1.msra.mxu0 0.0
        %1774 = vmatprep.subr.mxu0 0.0
        %1775 = vmatpush1.msra.mxu0 0.0
        %1776 = vmatprep.subr.mxu0 0.0
        %1777 = vmatpush1.msra.mxu0 0.0
        %1778 = vmatprep.subr.mxu0 0.0
        %1779 = vmatpush1.msra.mxu0 0.0
        %1780 = vmatprep.subr.mxu0 0.0
        %1781 = vmatpush1.msra.mxu0 0.0
        %1782 = vmatprep.subr.mxu0 0.0
        %1783 = vmatpush1.msra.mxu0 0.0
        %1784 = vmatprep.subr.mxu0 0.0
        %1785 = vmatpush1.msra.mxu0 0.0
        %1786 = vmatprep.subr.mxu0 0.0
        %1787 = vmatpush1.msra.mxu0 0.0
        %1788 = vmatprep.subr.mxu0 0.0
        %1789 = vmatpush1.msra.mxu0 0.0
        %1790 = vmatprep.subr.mxu0 0.0
        %1791 = vmatpush1.msra.mxu0 0.0
        %1792 = vmatprep.subr.mxu0 0.0
        %1793 = vmatpush1.msra.mxu0 0.0
        %1794 = vmatprep.subr.mxu0 0.0
        %1795 = vmatpush1.msra.mxu0 0.0
        %1796 = vmatprep.subr.mxu0 0.0
        %1797 = vmatpush1.msra.mxu0 0.0
        %1798 = vmatprep.subr.mxu0 0.0
        %1799 = vmatpush1.msra.mxu0 0.0
        %1800 = vmatprep.subr.mxu0 0.0
        %1801 = vmatpush1.msra.mxu0 0.0
        %1802 = vmatprep.subr.mxu0 0.0
        %1803 = vmatpush1.msra.mxu0 0.0
        %1804 = vmatprep.subr.mxu0 0.0
        %1805 = vmatpush1.msra.mxu0 0.0
        %1806 = vmatprep.subr.mxu0 0.0
        %1807 = vmatpush1.msra.mxu0 0.0
        %1808 = vmatprep.subr.mxu0 0.0
        %1809 = vmatpush1.msra.mxu0 0.0
        %1810 = vmatprep.subr.mxu0 0.0
        %1811 = vmatpush1.msra.mxu0 0.0
        %1812 = vmatprep.subr.mxu0 0.0
        %1813 = vmatpush1.msra.mxu0 0.0
        %1814 = vmatprep.subr.mxu0 0.0
        %1815 = vmatpush1.msra.mxu0 0.0
        %1816 = vmatprep.subr.mxu0 0.0
        %1817 = vmatpush1.msra.mxu0 0.0
        %1818 = vmatprep.subr.mxu0 0.0
        %1819 = vmatpush1.msra.mxu0 0.0
        %1820 = vmatprep.subr.mxu0 0.0
        %1821 = vmatpush1.msra.mxu0 0.0
        %1822 = vmatprep.subr.mxu0 0.0
        %1823 = vmatpush1.msra.mxu0 0.0
        %1824 = vmatprep.subr.mxu0 0.0
        %1825 = vmatpush1.msra.mxu0 0.0
        %1826 = vmatprep.subr.mxu0 0.0
        %1827 = vmatpush1.msra.mxu0 0.0
        %1828 = vmatprep.mubr.f32.mxu0 0.0
        %1829 = vmatmul.mubr.f32.gmra.mrb[0].mxu0 %v1762
        %v1830 = vpop.f32.mrb[0].mxu0
        %v1831 = vadd.f32 0.0, %v1830
        %v1832 = vpop.f32.mrb[0].mxu0
        %1833 = vdwg.mxu0
        %1834 = vrot.lane.b32.xlu0 %v1249, 72
        %v1835 = vpop.permute.xlu0 %1834
        %v1838 = vsel %vm306, %v1605, 0
        %1840 = vmatprep.subr.mxu0 0.0
        %1841 = vmatpush1.msra.mxu0 %v1835
        %1842 = vmatprep.subr.mxu0 0.0
        %1843 = vmatpush1.msra.mxu0 0.0
        %1844 = vmatprep.subr.mxu0 0.0
        %1845 = vmatpush1.msra.mxu0 0.0
        %1846 = vmatprep.subr.mxu0 0.0
        %1847 = vmatpush1.msra.mxu0 0.0
        %1848 = vmatprep.subr.mxu0 0.0
        %1849 = vmatpush1.msra.mxu0 0.0
        %1850 = vmatprep.subr.mxu0 0.0
        %1851 = vmatpush1.msra.mxu0 0.0
        %1852 = vmatprep.subr.mxu0 0.0
        %1853 = vmatpush1.msra.mxu0 0.0
        %1854 = vmatprep.subr.mxu0 0.0
        %1855 = vmatpush1.msra.mxu0 0.0
        %1856 = vmatprep.subr.mxu0 0.0
        %1857 = vmatpush1.msra.mxu0 0.0
        %1858 = vmatprep.subr.mxu0 0.0
        %1859 = vmatpush1.msra.mxu0 0.0
        %1860 = vmatprep.subr.mxu0 0.0
        %1861 = vmatpush1.msra.mxu0 0.0
        %1862 = vmatprep.subr.mxu0 0.0
        %1863 = vmatpush1.msra.mxu0 0.0
        %1864 = vmatprep.subr.mxu0 0.0
        %1865 = vmatpush1.msra.mxu0 0.0
        %1866 = vmatprep.subr.mxu0 0.0
        %1867 = vmatpush1.msra.mxu0 0.0
        %1868 = vmatprep.subr.mxu0 0.0
        %1869 = vmatpush1.msra.mxu0 0.0
        %1870 = vmatprep.subr.mxu0 0.0
        %1871 = vmatpush1.msra.mxu0 0.0
        %1872 = vmatprep.subr.mxu0 0.0
        %1873 = vmatpush1.msra.mxu0 0.0
        %1874 = vmatprep.subr.mxu0 0.0
        %1875 = vmatpush1.msra.mxu0 0.0
        %1876 = vmatprep.subr.mxu0 0.0
        %1877 = vmatpush1.msra.mxu0 0.0
        %1878 = vmatprep.subr.mxu0 0.0
        %1879 = vmatpush1.msra.mxu0 0.0
        %1880 = vmatprep.subr.mxu0 0.0
        %1881 = vmatpush1.msra.mxu0 0.0
        %1882 = vmatprep.subr.mxu0 0.0
        %1883 = vmatpush1.msra.mxu0 0.0
        %1884 = vmatprep.subr.mxu0 0.0
        %1885 = vmatpush1.msra.mxu0 0.0
        %1886 = vmatprep.subr.mxu0 0.0
        %1887 = vmatpush1.msra.mxu0 0.0
        %1888 = vmatprep.subr.mxu0 0.0
        %1889 = vmatpush1.msra.mxu0 0.0
        %1890 = vmatprep.subr.mxu0 0.0
        %1891 = vmatpush1.msra.mxu0 0.0
        %1892 = vmatprep.subr.mxu0 0.0
        %1893 = vmatpush1.msra.mxu0 0.0
        %1894 = vmatprep.subr.mxu0 0.0
        %1895 = vmatpush1.msra.mxu0 0.0
        %1896 = vmatprep.subr.mxu0 0.0
        %1897 = vmatpush1.msra.mxu0 0.0
        %1898 = vmatprep.subr.mxu0 0.0
        %1899 = vmatpush1.msra.mxu0 0.0
        %1900 = vmatprep.subr.mxu0 0.0
        %1901 = vmatpush1.msra.mxu0 0.0
        %1902 = vmatprep.subr.mxu0 0.0
        %1903 = vmatpush1.msra.mxu0 0.0
        %1904 = vmatprep.mubr.f32.mxu0 0.0
        %1905 = vmatmul.mubr.f32.gmra.mrb[0].mxu0 %v1838
        %v1906 = vpop.f32.mrb[0].mxu0
        %v1907 = vadd.f32 0.0, %v1906
        %v1908 = vpop.f32.mrb[0].mxu0
        %1909 = vdwg.mxu0
        %1911 = vrot.lane.b32.xlu0 %v1755, 8
        %v1912 = vpop.permute.xlu0 %1911
        %1915 = vrot.lane.b32.xlu0 %v1831, 16
        %v1916 = vpop.permute.xlu0 %1915
        %1919 = vrot.lane.b32.xlu0 %v1907, 24
        %v1920 = vpop.permute.xlu0 %1919
        %v1922 = vsel %vm306, %v1679, %v1912
        %v1923 = vsel %vm976, %v1922, %v1916
        %v1924 = vsel %vm978, %v1923, %v1920
        %v1925 = vlaneseq
        %v1926 = vshrl.u32 %v1925, 7
        %v1927 = vsub.s32 0, %v1926
        %v1928 = vrot.slane %v216, %v1927
        %v1930 = vsel %vm229, %v1924, 0
        %1932 = vmatprep.subr.mxu0 0.0
        %1933 = vmatpush1.msra.mxu0 %v197
        %1934 = vmatprep.subr.mxu0 0.0
        %1935 = vmatpush1.msra.mxu0 %v198
        %1936 = vmatprep.subr.mxu0 0.0
        %1937 = vmatpush1.msra.mxu0 %v199
        %1938 = vmatprep.subr.mxu0 0.0
        %1939 = vmatpush1.msra.mxu0 %v200
        %1940 = vmatprep.subr.mxu0 0.0
        %1941 = vmatpush1.msra.mxu0 0.0
        %1942 = vmatprep.subr.mxu0 0.0
        %1943 = vmatpush1.msra.mxu0 0.0
        %1944 = vmatprep.subr.mxu0 0.0
        %1945 = vmatpush1.msra.mxu0 0.0
        %1946 = vmatprep.subr.mxu0 0.0
        %1947 = vmatpush1.msra.mxu0 0.0
        %1948 = vmatprep.subr.mxu0 0.0
        %1949 = vmatpush1.msra.mxu0 0.0
        %1950 = vmatprep.subr.mxu0 0.0
        %1951 = vmatpush1.msra.mxu0 0.0
        %1952 = vmatprep.subr.mxu0 0.0
        %1953 = vmatpush1.msra.mxu0 0.0
        %1954 = vmatprep.subr.mxu0 0.0
        %1955 = vmatpush1.msra.mxu0 0.0
        %1956 = vmatprep.subr.mxu0 0.0
        %1957 = vmatpush1.msra.mxu0 0.0
        %1958 = vmatprep.subr.mxu0 0.0
        %1959 = vmatpush1.msra.mxu0 0.0
        %1960 = vmatprep.subr.mxu0 0.0
        %1961 = vmatpush1.msra.mxu0 0.0
        %1962 = vmatprep.subr.mxu0 0.0
        %1963 = vmatpush1.msra.mxu0 0.0
        %1964 = vmatprep.subr.mxu0 0.0
        %1965 = vmatpush1.msra.mxu0 0.0
        %1966 = vmatprep.subr.mxu0 0.0
        %1967 = vmatpush1.msra.mxu0 0.0
        %1968 = vmatprep.subr.mxu0 0.0
        %1969 = vmatpush1.msra.mxu0 0.0
        %1970 = vmatprep.subr.mxu0 0.0
        %1971 = vmatpush1.msra.mxu0 0.0
        %1972 = vmatprep.subr.mxu0 0.0
        %1973 = vmatpush1.msra.mxu0 0.0
        %1974 = vmatprep.subr.mxu0 0.0
        %1975 = vmatpush1.msra.mxu0 0.0
        %1976 = vmatprep.subr.mxu0 0.0
        %1977 = vmatpush1.msra.mxu0 0.0
        %1978 = vmatprep.subr.mxu0 0.0
        %1979 = vmatpush1.msra.mxu0 0.0
        %1980 = vmatprep.subr.mxu0 0.0
        %1981 = vmatpush1.msra.mxu0 0.0
        %1982 = vmatprep.subr.mxu0 0.0
        %1983 = vmatpush1.msra.mxu0 0.0
        %1984 = vmatprep.subr.mxu0 0.0
        %1985 = vmatpush1.msra.mxu0 0.0
        %1986 = vmatprep.subr.mxu0 0.0
        %1987 = vmatpush1.msra.mxu0 0.0
        %1988 = vmatprep.subr.mxu0 0.0
        %1989 = vmatpush1.msra.mxu0 0.0
        %1990 = vmatprep.subr.mxu0 0.0
        %1991 = vmatpush1.msra.mxu0 0.0
        %1992 = vmatprep.subr.mxu0 0.0
        %1993 = vmatpush1.msra.mxu0 0.0
        %1994 = vmatprep.subr.mxu0 0.0
        %1995 = vmatpush1.msra.mxu0 0.0
        %1996 = vmatprep.mubr.f32.mxu0 0.0
        %1997 = vmatmul.mubr.f32.gmra.mrb[0].mxu0 %v1930
        %v1998 = vpop.f32.mrb[0].mxu0
        %v1999 = vadd.f32 %v1928, %v1998
        %v2000 = vpop.f32.mrb[0].mxu0
        %2001 = vdwg.mxu0
        %v2002 = vadd.f32 %v1081, %v1999
        %v2003 = vsel %vm229, %v2002, 0.0
        %2004 = vadd.xlane.f32.xlu0 %v2003
        %v2005 = vpop.xlane.xlu0 %2004
        %v2006 = vmul.f32 %v2005, %v1061
        %v2007 = vsub.f32 %v2002, %v2006
        %v2008 = vmul.f32 %v2007, %v2007
        %v2009 = vsel %vm229, %v2008, 0.0
        %2010 = vadd.xlane.f32.xlu0 %v2009
        %v2011 = vpop.xlane.xlu0 %2010
        %v2012 = vmul.f32 %v2011, %v1061
        %v2013 = vadd.f32 %v2012, 1e-05
        %v2014 = vrsqrt.pop %v2013
        %v2015 = vmul.f32 %v2007, %v2014
        %v2016 = vlaneseq
        %v2017 = vshrl.u32 %v2016, 7
        %v2018 = vsub.s32 0, %v2017
        %v2019 = vrot.slane %v221, %v2018
        %v2020 = vmul.f32 %v2015, %v2019
        %v2021 = vlaneseq
        %v2022 = vshrl.u32 %v2021, 7
        %v2023 = vsub.s32 0, %v2022
        %v2024 = vrot.slane %v222, %v2023
        %v2025 = vadd.f32 %v2020, %v2024
        %v2026 = vlaneseq
        %v2027 = vshrl.u32 %v2026, 7
        %v2028 = vsub.s32 0, %v2027
        %v2029 = vrot.slane %v217, %v2028
        %v2031 = vsel %vm229, %v2025, 0
        %2033 = vmatprep.subr.mxu0 0.0
        %2034 = vmatpush1.msra.mxu0 %v201
        %2035 = vmatprep.subr.mxu0 0.0
        %2036 = vmatpush1.msra.mxu0 %v202
        %2037 = vmatprep.subr.mxu0 0.0
        %2038 = vmatpush1.msra.mxu0 %v203
        %2039 = vmatprep.subr.mxu0 0.0
        %2040 = vmatpush1.msra.mxu0 %v204
        %2041 = vmatprep.subr.mxu0 0.0
        %2042 = vmatpush1.msra.mxu0 0.0
        %2043 = vmatprep.subr.mxu0 0.0
        %2044 = vmatpush1.msra.mxu0 0.0
        %2045 = vmatprep.subr.mxu0 0.0
        %2046 = vmatpush1.msra.mxu0 0.0
        %2047 = vmatprep.subr.mxu0 0.0
        %2048 = vmatpush1.msra.mxu0 0.0
        %2049 = vmatprep.subr.mxu0 0.0
        %2050 = vmatpush1.msra.mxu0 0.0
        %2051 = vmatprep.subr.mxu0 0.0
        %2052 = vmatpush1.msra.mxu0 0.0
        %2053 = vmatprep.subr.mxu0 0.0
        %2054 = vmatpush1.msra.mxu0 0.0
        %2055 = vmatprep.subr.mxu0 0.0
        %2056 = vmatpush1.msra.mxu0 0.0
        %2057 = vmatprep.subr.mxu0 0.0
        %2058 = vmatpush1.msra.mxu0 0.0
        %2059 = vmatprep.subr.mxu0 0.0
        %2060 = vmatpush1.msra.mxu0 0.0
        %2061 = vmatprep.subr.mxu0 0.0
        %2062 = vmatpush1.msra.mxu0 0.0
        %2063 = vmatprep.subr.mxu0 0.0
        %2064 = vmatpush1.msra.mxu0 0.0
        %2065 = vmatprep.subr.mxu0 0.0
        %2066 = vmatpush1.msra.mxu0 0.0
        %2067 = vmatprep.subr.mxu0 0.0
        %2068 = vmatpush1.msra.mxu0 0.0
        %2069 = vmatprep.subr.mxu0 0.0
        %2070 = vmatpush1.msra.mxu0 0.0
        %2071 = vmatprep.subr.mxu0 0.0
        %2072 = vmatpush1.msra.mxu0 0.0
        %2073 = vmatprep.subr.mxu0 0.0
        %2074 = vmatpush1.msra.mxu0 0.0
        %2075 = vmatprep.subr.mxu0 0.0
        %2076 = vmatpush1.msra.mxu0 0.0
        %2077 = vmatprep.subr.mxu0 0.0
        %2078 = vmatpush1.msra.mxu0 0.0
        %2079 = vmatprep.subr.mxu0 0.0
        %2080 = vmatpush1.msra.mxu0 0.0
        %2081 = vmatprep.subr.mxu0 0.0
        %2082 = vmatpush1.msra.mxu0 0.0
        %2083 = vmatprep.subr.mxu0 0.0
        %2084 = vmatpush1.msra.mxu0 0.0
        %2085 = vmatprep.subr.mxu0 0.0
        %2086 = vmatpush1.msra.mxu0 0.0
        %2087 = vmatprep.subr.mxu0 0.0
        %2088 = vmatpush1.msra.mxu0 0.0
        %2089 = vmatprep.subr.mxu0 0.0
        %2090 = vmatpush1.msra.mxu0 0.0
        %2091 = vmatprep.subr.mxu0 0.0
        %2092 = vmatpush1.msra.mxu0 0.0
        %2093 = vmatprep.subr.mxu0 0.0
        %2094 = vmatpush1.msra.mxu0 0.0
        %2095 = vmatprep.subr.mxu0 0.0
        %2096 = vmatpush1.msra.mxu0 0.0
        %2097 = vmatprep.mubr.f32.mxu0 0.0
        %2098 = vmatmul.mubr.f32.gmra.mrb[0].mxu0 %v2031
        %v2099 = vpop.f32.mrb[0].mxu0
        %v2100 = vadd.f32 %v2029, %v2099
        %v2101 = vpop.f32.mrb[0].mxu0
        %2102 = vdwg.mxu0
        %v2103 = vmax.f32 %v2100, 0.0
        %v2104 = vlaneseq
        %v2105 = vshrl.u32 %v2104, 7
        %v2106 = vsub.s32 0, %v2105
        %v2107 = vrot.slane %v218, %v2106
        %vm2108 = vcmask 523264
        %v2110 = vsel %vm2108, %v2103, 0
        %2112 = vmatprep.subr.mxu0 0.0
        %2113 = vmatpush1.msra.mxu0 %v205
        %2114 = vmatprep.subr.mxu0 0.0
        %2115 = vmatpush1.msra.mxu0 %v206
        %2116 = vmatprep.subr.mxu0 0.0
        %2117 = vmatpush1.msra.mxu0 %v207
        %2118 = vmatprep.subr.mxu0 0.0
        %2119 = vmatpush1.msra.mxu0 %v208
        %2120 = vmatprep.subr.mxu0 0.0
        %2121 = vmatpush1.msra.mxu0 %v209
        %2122 = vmatprep.subr.mxu0 0.0
        %2123 = vmatpush1.msra.mxu0 %v210
        %2124 = vmatprep.subr.mxu0 0.0
        %2125 = vmatpush1.msra.mxu0 %v211
        %2126 = vmatprep.subr.mxu0 0.0
        %2127 = vmatpush1.msra.mxu0 %v212
        %2128 = vmatprep.subr.mxu0 0.0
        %2129 = vmatpush1.msra.mxu0 0.0
        %2130 = vmatprep.subr.mxu0 0.0
        %2131 = vmatpush1.msra.mxu0 0.0
        %2132 = vmatprep.subr.mxu0 0.0
        %2133 = vmatpush1.msra.mxu0 0.0
        %2134 = vmatprep.subr.mxu0 0.0
        %2135 = vmatpush1.msra.mxu0 0.0
        %2136 = vmatprep.subr.mxu0 0.0
        %2137 = vmatpush1.msra.mxu0 0.0
        %2138 = vmatprep.subr.mxu0 0.0
        %2139 = vmatpush1.msra.mxu0 0.0
        %2140 = vmatprep.subr.mxu0 0.0
        %2141 = vmatpush1.msra.mxu0 0.0
        %2142 = vmatprep.subr.mxu0 0.0
        %2143 = vmatpush1.msra.mxu0 0.0
        %2144 = vmatprep.subr.mxu0 0.0
        %2145 = vmatpush1.msra.mxu0 0.0
        %2146 = vmatprep.subr.mxu0 0.0
        %2147 = vmatpush1.msra.mxu0 0.0
        %2148 = vmatprep.subr.mxu0 0.0
        %2149 = vmatpush1.msra.mxu0 0.0
        %2150 = vmatprep.subr.mxu0 0.0
        %2151 = vmatpush1.msra.mxu0 0.0
        %2152 = vmatprep.subr.mxu0 0.0
        %2153 = vmatpush1.msra.mxu0 0.0
        %2154 = vmatprep.subr.mxu0 0.0
        %2155 = vmatpush1.msra.mxu0 0.0
        %2156 = vmatprep.subr.mxu0 0.0
        %2157 = vmatpush1.msra.mxu0 0.0
        %2158 = vmatprep.subr.mxu0 0.0
        %2159 = vmatpush1.msra.mxu0 0.0
        %2160 = vmatprep.subr.mxu0 0.0
        %2161 = vmatpush1.msra.mxu0 0.0
        %2162 = vmatprep.subr.mxu0 0.0
        %2163 = vmatpush1.msra.mxu0 0.0
        %2164 = vmatprep.subr.mxu0 0.0
        %2165 = vmatpush1.msra.mxu0 0.0
        %2166 = vmatprep.subr.mxu0 0.0
        %2167 = vmatpush1.msra.mxu0 0.0
        %2168 = vmatprep.subr.mxu0 0.0
        %2169 = vmatpush1.msra.mxu0 0.0
        %2170 = vmatprep.subr.mxu0 0.0
        %2171 = vmatpush1.msra.mxu0 0.0
        %2172 = vmatprep.subr.mxu0 0.0
        %2173 = vmatpush1.msra.mxu0 0.0
        %2174 = vmatprep.subr.mxu0 0.0
        %2175 = vmatpush1.msra.mxu0 0.0
        %2176 = vmatprep.mubr.f32.mxu0 0.0
        %2177 = vmatmul.mubr.f32.gmra.mrb[0].mxu0 %v2110
        %v2178 = vpop.f32.mrb[0].mxu0
        %v2179 = vadd.f32 %v2107, %v2178
        %v2180 = vpop.f32.mrb[0].mxu0
        %2181 = vdwg.mxu0
        %v2182 = vadd.f32 %v2025, %v2179
        %v2183 = vsel %vm229, %v2182, 0.0
        %2184 = vadd.xlane.f32.xlu0 %v2183
        %v2185 = vpop.xlane.xlu0 %2184
        %v2186 = vmul.f32 %v2185, %v1061
        %v2187 = vsub.f32 %v2182, %v2186
        %v2188 = vmul.f32 %v2187, %v2187
        %v2189 = vsel %vm229, %v2188, 0.0
        %2190 = vadd.xlane.f32.xlu0 %v2189
        %v2191 = vpop.xlane.xlu0 %2190
        %v2192 = vmul.f32 %v2191, %v1061
        %v2193 = vadd.f32 %v2192, 1e-05
        %v2194 = vrsqrt.pop %v2193
        %v2195 = vmul.f32 %v2187, %v2194
        %v2196 = vlaneseq
        %v2197 = vshrl.u32 %v2196, 7
        %v2198 = vsub.s32 0, %v2197
        %v2199 = vrot.slane %v223, %v2198
        %v2200 = vmul.f32 %v2195, %v2199
        %v2201 = vlaneseq
        %v2202 = vshrl.u32 %v2201, 7
        %v2203 = vsub.s32 0, %v2202
        %v2204 = vrot.slane %v224, %v2203
        %v2205 = vadd.f32 %v2200, %v2204
        %2206 = vst.msk [vmem:[%s174] sm:$0xff] %vm229, %v2205
        %s2207 = sand.u32 %s98, 1
        %s2208 = scalar_lea.sflag [#allocation3], %s2207
        %s2209 = sand.u32 %s98, 1
        %s2210 = smul.addr %s2209, 8
        %s2211 = scalar_lea.vmem [#allocation2], %s2210
        // Predicated region
        $region33: #{transformer_block.1} parent=31 // pred_check
          %p2212 = pneg %p108
        $region34: #{transformer_block.1} parent=31 // pred_check_branch
          %2214 = sbr.rel (%p2212) target = $region36
        $region35: #{transformer_block.1} parent=31 // pred_region
          %s2216 = ssub.s32 128, 128
          %2217 = vsyncadd %s2208, %s2216
          %s2218 = smul.addr %s17, 128
          %s2219 = scalar_lea.hbm %s3, %s2218
          %s2221 = sshll.u32 %s2211, 4
          %s2222 = int_to_ptr.vmem [resolvable:$true] %s2221
          %2224 = dma.vmem_to_hbm [thread:$0]  %s2222, 128, %s2219, %s2208
        $region36: #{transformer_block.1} parent=31 // pred_fallthru
          _
      $region32: #{transformer_block.1} parent=5 // pred_fallthru
        _
      %p2225 = scmp.le.s32.totalorder 2, %s12
      // Predicated region
      $region37: #{transformer_block.1} parent=5 // pred_check
        %p2226 = pneg %p2225
      $region38: #{transformer_block.1} parent=5 // pred_check_branch
        %2228 = sbr.rel (%p2226) target = $region40
      $region39: #{transformer_block.1} parent=5 // pred_region
        %s2229 = ssub.s32 %s12, 2
        // Predicated region
        $region41: #{transformer_block.1} parent=39 // pred_check
          %p2230 = pneg %p114
        $region42: #{transformer_block.1} parent=39 // pred_check_branch
          %2232 = sbr.rel (%p2230) target = $region44
        $region43: #{transformer_block.1} parent=39 // pred_region
          %s2233 = sand.u32 %s99, 1
          %s2234 = scalar_lea.sflag [#allocation3], %s2233
          %s2235 = sand.u32 %s99, 1
          %s2236 = smul.addr %s2235, 8
          %s2237 = scalar_lea.vmem [#allocation2], %s2236
          %2238 = dma.done %s2234, 128
        $region44: #{transformer_block.1} parent=39 // pred_fallthru
          _
      $region40: #{transformer_block.1} parent=5 // pred_fallthru
        _
    $region6: #{transformer_block.1} parent=1 // loop_footer
      %s16 = sadd.s32 1, %s12
    $region7: #{transformer_block.1} parent=1 // loop_footer_branch
      %11 = sbr.rel target = $region3
    $region8: #{transformer_block.1} parent=1 // loop_exit
      _
    %2239 = vsyncpa [#allocation3], 1
    %s2240 = scalar_lea.sflag [#allocation3], 1
    %2241 = vsyncpa %s2240, 1

</llo_original>
